<compile_context>
chip_gen: v7x
topology: tpu7x:2x2x1
jax: 0.10.0
libtpu: 0.0.40
codegen_flags: <defaults>
</compile_context>

<pallas_src>
import jax
import jax.numpy as jnp
from jax.experimental import pallas as pl
from jax.experimental.pallas import tpu as pltpu


# ----------------------------------------------------------------------------
# Helpers
# ----------------------------------------------------------------------------
def _round_up(n, m):
    return ((n + m - 1) // m) * m


def _sublane(dtype):
    return {4: 8, 2: 16, 1: 32}[jnp.dtype(dtype).itemsize]


def _pad2(a, rows, cols):
    r, c = a.shape
    if (r, c) == (rows, cols):
        return a
    return jnp.pad(a, ((0, rows - r), (0, cols - c)))


def _row_tiling(M, dtype, tm_max=256):
    """Even row tiles; >=2 grid steps (megacore) whenever the batch allows."""
    sub = _sublane(dtype)
    n_tiles = max(2, pl.cdiv(M, tm_max)) if M >= 2 * sub else 1
    tm = _round_up(pl.cdiv(M, n_tiles), sub)
    Mp = tm * pl.cdiv(M, tm)
    return tm, Mp


_V5E_DEFAULT_SCOPED_VMEM = 16 * 1024 * 1024   # most conservative default limit


def _compiler_params(vmem_footprint_bytes):
    """Generation-aware VMEM limit: raise only if needed, cap <= ~87.5% physical."""
    kwargs = dict(dimension_semantics=("parallel",))
    need = int(1.25 * vmem_footprint_bytes) + (2 << 20)
    if need > _V5E_DEFAULT_SCOPED_VMEM:
        try:
            cap = pltpu.get_tpu_info().vmem_capacity_bytes
        except Exception:
            cap = 64 * 1024 * 1024            # v7x per-TC VMEM (smallest current)
        kwargs["vmem_limit_bytes"] = int(min(need, 0.875 * cap))
    return pltpu.CompilerParams(**kwargs)


# ----------------------------------------------------------------------------
# Fused kernel (one row tile through the whole MLP)
# ----------------------------------------------------------------------------
def _make_fused_kernel(num_hidden, compute_dtype):
    """refs = (x, [Wt_i, b_i, Ct_i] * num_hidden, Wt_out, b_out, o).

    All weights are pre-transposed to contracting-dim-first (K, N) layout, so
    every matmul is a plain (M,K)@(K,N) on the MXU with f32 accumulation.
    """

    def kernel(*refs):
        x_ref, o_ref = refs[0], refs[-1]
        h = x_ref[...]                                          # (tm, Kp) bf16
        for layer in range(num_hidden):
            wt_ref, b_ref, ct_ref = refs[1 + 3 * layer: 4 + 3 * layer]
            # z = h @ W.T + b   (bias kept f32, added after f32 accumulation)
            z = jnp.dot(h, wt_ref[...],
                        preferred_element_type=jnp.float32) + b_ref[...]
            # AsymSwiGLU: sigmoid(z @ C.T) * z  (gate logits on the MXU,
            # sigmoid on the EUP, multiply on the VPU -- f32 epilogue)
            logits = jnp.dot(z.astype(compute_dtype), ct_ref[...],
                             preferred_element_type=jnp.float32)
            h = (jax.nn.sigmoid(logits) * z).astype(compute_dtype)
        wt_ref, b_ref = refs[1 + 3 * num_hidden], refs[2 + 3 * num_hidden]
        y = jnp.dot(h, wt_ref[...],
                    preferred_element_type=jnp.float32) + b_ref[...]
        o_ref[...] = y.astype(o_ref.dtype)

    return kernel


# ----------------------------------------------------------------------------
# One-time parameter preparation (amortized over forward calls)
# ----------------------------------------------------------------------------
def prepare_sigma_mlp_params(weights, biases, Cs, compute_dtype=jnp.bfloat16):
    """Cast to the MXU dtype, transpose to (K, N) contracting-dim-first layout
    and zero-pad every feature axis to a multiple of 128 -- once, at init."""
    num_layers = len(weights)
    assert len(biases) == num_layers and len(Cs) == num_layers - 1

    hidden = []
    for li in range(num_layers - 1):
        W, b, C = weights[li], biases[li], Cs[li]
        H, K = W.shape
        Kp, Hp = _round_up(K, 128), _round_up(H, 128)
        hidden.append((
            _pad2(W.T.astype(compute_dtype), Kp, Hp),                 # (Kp, Hp)
            jnp.pad(b.astype(jnp.float32), (0, Hp - H)).reshape(1, Hp),
            _pad2(C.T.astype(compute_dtype), Hp, Hp),                 # (Hp, Hp)
        ))

    W, b = weights[-1], biases[-1]
    N, K = W.shape
    Kp, Np = _round_up(K, 128), _round_up(N, 128)
    final = (
        _pad2(W.T.astype(compute_dtype), Kp, Np),                     # (Kp, Np)
        jnp.pad(b.astype(jnp.float32), (0, Np - N)).reshape(1, Np),
    )
    meta = dict(in_features=weights[0].shape[1], out_features=N,
                compute_dtype=jnp.dtype(compute_dtype))
    return dict(hidden=hidden, final=final, meta=meta)


# ----------------------------------------------------------------------------
# SigmaMLP forward (norm=None, asym_act=True) -- one pallas_call
# ----------------------------------------------------------------------------
def sigma_mlp_forward(x, params, *, tm_max=256):
    meta = params["meta"]
    cd = meta["compute_dtype"]
    out_dtype = x.dtype

    x2 = x.reshape(x.shape[0], -1)                     # nn.Flatten
    M, K = x2.shape
    assert K == meta["in_features"]

    Kp_in = _round_up(K, 128)
    tm, Mp = _row_tiling(M, cd, tm_max)
    xp = _pad2(x2.astype(cd), Mp, Kp_in)               # only x is padded per call

    flat_weights = []
    for Wt, b, Ct in params["hidden"]:
        flat_weights += [Wt, b, Ct]
    flat_weights += list(params["final"])
    num_hidden = len(params["hidden"])
    Np = params["final"][0].shape[1]

    kernel = _make_fused_kernel(num_hidden, cd)

    weight_bytes = sum(w.size * w.dtype.itemsize for w in flat_weights)
    max_feat = max([Kp_in, Np] + [w.shape[-1] for w in flat_weights])

    def run(weight_mode, weight_buffers):
        footprint = (weight_buffers * weight_bytes
                     + 2 * tm * Kp_in * jnp.dtype(cd).itemsize        # x (2-buf)
                     + 2 * tm * Np * jnp.dtype(out_dtype).itemsize    # out (2-buf)
                     + 6 * tm * max_feat * 4)                         # f32 temps
        if weight_mode is None:
            w_spec = lambda shape: pl.BlockSpec(shape, lambda i: (0, 0))
        else:
            w_spec = lambda shape: pl.BlockSpec(shape, lambda i: (0, 0),
                                                pipeline_mode=weight_mode)
        return pl.pallas_call(
            kernel,
            out_shape=jax.ShapeDtypeStruct((Mp, Np), out_dtype),
            grid_spec=pltpu.PrefetchScalarGridSpec(
                num_scalar_prefetch=0,
                grid=(Mp // tm,),
                in_specs=[pl.BlockSpec((tm, Kp_in), lambda i: (i, 0))]
                         + [w_spec(w.shape) for w in flat_weights],
                out_specs=pl.BlockSpec((tm, Np), lambda i: (i, 0)),
            ),
            compiler_params=_compiler_params(footprint),
        )(xp, *flat_weights)

    try:
        # Grid-invariant weights: single-buffered (index_map is constant, so
        # no re-DMA is ever issued; halves their VMEM footprint).
        out = run(pl.Buffered(1), 1)
    except Exception:
        # Fallback for environments where pipeline_mode is unsupported:
        # default double-buffered weight specs (numerically identical).
        out = run(None, 2)

    return out[:M, :meta["out_features"]]


# ----------------------------------------------------------------------------
# Pure-JAX reference
# ----------------------------------------------------------------------------
def sigma_mlp_ref(x, weights, biases, Cs, compute_dtype=None):
    """compute_dtype=None reproduces the all-f32 PyTorch module;
    compute_dtype=jnp.bfloat16 mirrors the kernel's MXU dtype policy
    (bf16 operands, f32 accumulation / epilogue)."""
    cast = ((lambda a: a.astype(compute_dtype)) if compute_dtype is not None
            else (lambda a: a))
    h = cast(x.reshape(x.shape[0], -1))
    for W, b, C in zip(weights[:-1], biases[:-1], Cs):
        z = jnp.dot(h, cast(W).T, preferred_element_type=jnp.float32) + b
        gate = jax.nn.sigmoid(
            jnp.dot(cast(z), cast(C).T, preferred_element_type=jnp.float32))
        h = cast(gate * z)
    return jnp.dot(h, cast(weights[-1]).T,
                   preferred_element_type=jnp.float32) + biases[-1]


if __name__ == "__main__":
    # Small shapes consistent with the module: (batch, ch, width) flattened to
    # in_features; 3-layer MLP with AsymSwiGLU activations (norm=None).
    batch, ch, width = 16, 4, 8
    in_features = ch * width                       # 32
    hidden_dim, out_features, num_layers = 64, 8, 3

    key = jax.random.PRNGKey(0)
    k_iter = iter(jax.random.split(key, 3 * num_layers + 1))

    x = jax.random.normal(next(k_iter), (batch, ch, width), dtype=jnp.float32)

    dims = [in_features] + [hidden_dim] * (num_layers - 1) + [out_features]
    weights, biases, Cs = [], [], []
    for li in range(num_layers):
        fan_in, fan_out = dims[li], dims[li + 1]
        weights.append(
            jax.random.normal(next(k_iter), (fan_out, fan_in), dtype=jnp.float32)
            * (float(fan_in) ** -0.5))
        biases.append(
            jax.random.normal(next(k_iter), (fan_out,), dtype=jnp.float32) * 0.1)
        if li < num_layers - 1:
            # Deterministic stand-in for torch.randn(dim, dim, generator=g).
            Cs.append(jax.random.normal(next(k_iter), (hidden_dim, hidden_dim),
                                        dtype=jnp.float32))

    # One-time weight prep (pad + transpose + bf16 cast), amortized over calls.
    params = prepare_sigma_mlp_params(weights, biases, Cs,
                                      compute_dtype=jnp.bfloat16)

    out = jax.block_until_ready(sigma_mlp_forward(x, params))
    assert out.shape == (batch, out_features)
    assert out.dtype == x.dtype

    # Check against a pure-JAX reference that applies the same bf16-operand /
    # f32-accumulation policy (the all-f32 PyTorch module differs only by the
    # intentional bf16 MXU cast recommended in the perf review).
    ref = sigma_mlp_ref(x, weights, biases, Cs, compute_dtype=jnp.bfloat16)
    max_err = jnp.max(jnp.abs(out - ref))
    assert jnp.allclose(out, ref, atol=2e-3, rtol=2e-3), (
        f"mismatch vs bf16-matched reference, max abs err = {max_err}")

    print("KERNEL_OK")
</pallas_src>

<mosaic_0001>
module attributes {stable_mosaic.version = 11 : i64} {
  func.func @kernel(%arg0: i32, %arg1: memref<16x128xbf16, #tpu.memory_space<vmem>>, %arg2: memref<128x128xbf16, #tpu.memory_space<vmem>>, %arg3: memref<1x128xf32, #tpu.memory_space<vmem>>, %arg4: memref<128x128xbf16, #tpu.memory_space<vmem>>, %arg5: memref<128x128xbf16, #tpu.memory_space<vmem>>, %arg6: memref<1x128xf32, #tpu.memory_space<vmem>>, %arg7: memref<128x128xbf16, #tpu.memory_space<vmem>>, %arg8: memref<128x128xbf16, #tpu.memory_space<vmem>>, %arg9: memref<1x128xf32, #tpu.memory_space<vmem>>, %arg10: memref<16x128xf32, #tpu.memory_space<vmem>>) attributes {dimension_semantics = [#tpu.dimension_semantics<parallel>], iteration_bounds = array<i64: 1>, scalar_prefetch = 0 : i64, scratch_operands = 0 : i64, tpu.core_type = #tpu.core_type<tc>, window_params = [{transform_indices = @transform_0, window_bounds = array<i64: 16, 128>}, {pipeline_mode = #tpu.pipeline_mode<synchronous>, transform_indices = @transform_1, window_bounds = array<i64: 128, 128>}, {pipeline_mode = #tpu.pipeline_mode<synchronous>, transform_indices = @transform_2, window_bounds = array<i64: 1, 128>}, {pipeline_mode = #tpu.pipeline_mode<synchronous>, transform_indices = @transform_3, window_bounds = array<i64: 128, 128>}, {pipeline_mode = #tpu.pipeline_mode<synchronous>, transform_indices = @transform_4, window_bounds = array<i64: 128, 128>}, {pipeline_mode = #tpu.pipeline_mode<synchronous>, transform_indices = @transform_5, window_bounds = array<i64: 1, 128>}, {pipeline_mode = #tpu.pipeline_mode<synchronous>, transform_indices = @transform_6, window_bounds = array<i64: 128, 128>}, {pipeline_mode = #tpu.pipeline_mode<synchronous>, transform_indices = @transform_7, window_bounds = array<i64: 128, 128>}, {pipeline_mode = #tpu.pipeline_mode<synchronous>, transform_indices = @transform_8, window_bounds = array<i64: 1, 128>}, {transform_indices = @transform_9, window_bounds = array<i64: 16, 128>}]} {
    %c0 = arith.constant 0 : index
    %c0_0 = arith.constant 0 : index
    %0 = vector.load %arg1[%c0, %c0_0] : memref<16x128xbf16, #tpu.memory_space<vmem>>, vector<16x128xbf16>
    %c0_1 = arith.constant 0 : index
    %c0_2 = arith.constant 0 : index
    %1 = vector.load %arg2[%c0_1, %c0_2] : memref<128x128xbf16, #tpu.memory_space<vmem>>, vector<128x128xbf16>
    %cst = arith.constant dense<0.000000e+00> : vector<16x128xf32>
    %2 = tpu.matmul %0, %1, %cst {dimension_numbers = #tpu.dot_dimension_numbers<[1], [0], [0], [1], [0, 0, 1, 1], [], []>} : vector<16x128xbf16>, vector<128x128xbf16>, vector<16x128xf32> -> vector<16x128xf32>
    %c0_3 = arith.constant 0 : index
    %c0_4 = arith.constant 0 : index
    %3 = vector.load %arg3[%c0_3, %c0_4] : memref<1x128xf32, #tpu.memory_space<vmem>>, vector<1x128xf32>
    %4 = vector.broadcast %3 : vector<1x128xf32> to vector<16x128xf32>
    %5 = arith.addf %2, %4 : vector<16x128xf32>
    %6 = arith.truncf %5 : vector<16x128xf32> to vector<16x128xbf16>
    %c0_5 = arith.constant 0 : index
    %c0_6 = arith.constant 0 : index
    %7 = vector.load %arg4[%c0_5, %c0_6] : memref<128x128xbf16, #tpu.memory_space<vmem>>, vector<128x128xbf16>
    %cst_7 = arith.constant dense<0.000000e+00> : vector<16x128xf32>
    %8 = tpu.matmul %6, %7, %cst_7 {dimension_numbers = #tpu.dot_dimension_numbers<[1], [0], [0], [1], [0, 0, 1, 1], [], []>} : vector<16x128xbf16>, vector<128x128xbf16>, vector<16x128xf32> -> vector<16x128xf32>
    %9 = arith.negf %8 : vector<16x128xf32>
    %10 = math.exp %9 : vector<16x128xf32>
    %cst_8 = arith.constant 1.000000e+00 : f32
    %11 = vector.broadcast %cst_8 : f32 to vector<16x128xf32>
    %12 = arith.addf %11, %10 : vector<16x128xf32>
    %13 = arith.divf %11, %12 : vector<16x128xf32>
    %14 = arith.mulf %13, %5 : vector<16x128xf32>
    %15 = arith.truncf %14 : vector<16x128xf32> to vector<16x128xbf16>
    %c0_9 = arith.constant 0 : index
    %c0_10 = arith.constant 0 : index
    %16 = vector.load %arg5[%c0_9, %c0_10] : memref<128x128xbf16, #tpu.memory_space<vmem>>, vector<128x128xbf16>
    %cst_11 = arith.constant dense<0.000000e+00> : vector<16x128xf32>
    %17 = tpu.matmul %15, %16, %cst_11 {dimension_numbers = #tpu.dot_dimension_numbers<[1], [0], [0], [1], [0, 0, 1, 1], [], []>} : vector<16x128xbf16>, vector<128x128xbf16>, vector<16x128xf32> -> vector<16x128xf32>
    %c0_12 = arith.constant 0 : index
    %c0_13 = arith.constant 0 : index
    %18 = vector.load %arg6[%c0_12, %c0_13] : memref<1x128xf32, #tpu.memory_space<vmem>>, vector<1x128xf32>
    %19 = vector.broadcast %18 : vector<1x128xf32> to vector<16x128xf32>
    %20 = arith.addf %17, %19 : vector<16x128xf32>
    %21 = arith.truncf %20 : vector<16x128xf32> to vector<16x128xbf16>
    %c0_14 = arith.constant 0 : index
    %c0_15 = arith.constant 0 : index
    %22 = vector.load %arg7[%c0_14, %c0_15] : memref<128x128xbf16, #tpu.memory_space<vmem>>, vector<128x128xbf16>
    %cst_16 = arith.constant dense<0.000000e+00> : vector<16x128xf32>
    %23 = tpu.matmul %21, %22, %cst_16 {dimension_numbers = #tpu.dot_dimension_numbers<[1], [0], [0], [1], [0, 0, 1, 1], [], []>} : vector<16x128xbf16>, vector<128x128xbf16>, vector<16x128xf32> -> vector<16x128xf32>
    %24 = arith.negf %23 : vector<16x128xf32>
    %25 = math.exp %24 : vector<16x128xf32>
    %cst_17 = arith.constant 1.000000e+00 : f32
    %26 = vector.broadcast %cst_17 : f32 to vector<16x128xf32>
    %27 = arith.addf %26, %25 : vector<16x128xf32>
    %28 = arith.divf %26, %27 : vector<16x128xf32>
    %29 = arith.mulf %28, %20 : vector<16x128xf32>
    %30 = arith.truncf %29 : vector<16x128xf32> to vector<16x128xbf16>
    %c0_18 = arith.constant 0 : index
    %c0_19 = arith.constant 0 : index
    %31 = vector.load %arg8[%c0_18, %c0_19] : memref<128x128xbf16, #tpu.memory_space<vmem>>, vector<128x128xbf16>
    %cst_20 = arith.constant dense<0.000000e+00> : vector<16x128xf32>
    %32 = tpu.matmul %30, %31, %cst_20 {dimension_numbers = #tpu.dot_dimension_numbers<[1], [0], [0], [1], [0, 0, 1, 1], [], []>} : vector<16x128xbf16>, vector<128x128xbf16>, vector<16x128xf32> -> vector<16x128xf32>
    %c0_21 = arith.constant 0 : index
    %c0_22 = arith.constant 0 : index
    %33 = vector.load %arg9[%c0_21, %c0_22] : memref<1x128xf32, #tpu.memory_space<vmem>>, vector<1x128xf32>
    %34 = vector.broadcast %33 : vector<1x128xf32> to vector<16x128xf32>
    %35 = arith.addf %32, %34 : vector<16x128xf32>
    %c0_23 = arith.constant 0 : index
    %c0_24 = arith.constant 0 : index
    %36 = vector.load %arg10[%c0_23, %c0_24] : memref<16x128xf32, #tpu.memory_space<vmem>>, vector<16x128xf32>
    tpu.vector_store %arg10[%c0_23, %c0_24], %35 {strides = array<i32>} : memref<16x128xf32, #tpu.memory_space<vmem>>, vector<16x128xf32>,
    return
  }
  func.func @transform_0(%arg0: i32) -> (i32, i32) {
    %c0_i32 = arith.constant 0 : i32
    %c0_i32_0 = arith.constant 0 : i32
    return %arg0, %c0_i32 : i32, i32
  }
  func.func @transform_1(%arg0: i32) -> (i32, i32) {
    %c0_i32 = arith.constant 0 : i32
    %c0_i32_0 = arith.constant 0 : i32
    %c0_i32_1 = arith.constant 0 : i32
    return %c0_i32, %c0_i32_0 : i32, i32
  }
  func.func @transform_2(%arg0: i32) -> (i32, i32) {
    %c0_i32 = arith.constant 0 : i32
    %c0_i32_0 = arith.constant 0 : i32
    %c0_i32_1 = arith.constant 0 : i32
    return %c0_i32, %c0_i32_0 : i32, i32
  }
  func.func @transform_3(%arg0: i32) -> (i32, i32) {
    %c0_i32 = arith.constant 0 : i32
    %c0_i32_0 = arith.constant 0 : i32
    %c0_i32_1 = arith.constant 0 : i32
    return %c0_i32, %c0_i32_0 : i32, i32
  }
  func.func @transform_4(%arg0: i32) -> (i32, i32) {
    %c0_i32 = arith.constant 0 : i32
    %c0_i32_0 = arith.constant 0 : i32
    %c0_i32_1 = arith.constant 0 : i32
    return %c0_i32, %c0_i32_0 : i32, i32
  }
  func.func @transform_5(%arg0: i32) -> (i32, i32) {
    %c0_i32 = arith.constant 0 : i32
    %c0_i32_0 = arith.constant 0 : i32
    %c0_i32_1 = arith.constant 0 : i32
    return %c0_i32, %c0_i32_0 : i32, i32
  }
  func.func @transform_6(%arg0: i32) -> (i32, i32) {
    %c0_i32 = arith.constant 0 : i32
    %c0_i32_0 = arith.constant 0 : i32
    %c0_i32_1 = arith.constant 0 : i32
    return %c0_i32, %c0_i32_0 : i32, i32
  }
  func.func @transform_7(%arg0: i32) -> (i32, i32) {
    %c0_i32 = arith.constant 0 : i32
    %c0_i32_0 = arith.constant 0 : i32
    %c0_i32_1 = arith.constant 0 : i32
    return %c0_i32, %c0_i32_0 : i32, i32
  }
  func.func @transform_8(%arg0: i32) -> (i32, i32) {
    %c0_i32 = arith.constant 0 : i32
    %c0_i32_0 = arith.constant 0 : i32
    %c0_i32_1 = arith.constant 0 : i32
    return %c0_i32, %c0_i32_0 : i32, i32
  }
  func.func @transform_9(%arg0: i32) -> (i32, i32) {
    %c0_i32 = arith.constant 0 : i32
    %c0_i32_0 = arith.constant 0 : i32
    return %arg0, %c0_i32 : i32, i32
  }
}

module attributes {stable_mosaic.version = 11 : i64} {
  func.func @kernel(%arg0: i32, %arg1: memref<16x128xbf16, #tpu.memory_space<vmem>>, %arg2: memref<128x128xbf16, #tpu.memory_space<vmem>>, %arg3: memref<1x128xf32, #tpu.memory_space<vmem>>, %arg4: memref<128x128xbf16, #tpu.memory_space<vmem>>, %arg5: memref<128x128xbf16, #tpu.memory_space<vmem>>, %arg6: memref<1x128xf32, #tpu.memory_space<vmem>>, %arg7: memref<128x128xbf16, #tpu.memory_space<vmem>>, %arg8: memref<128x128xbf16, #tpu.memory_space<vmem>>, %arg9: memref<1x128xf32, #tpu.memory_space<vmem>>, %arg10: memref<16x128xf32, #tpu.memory_space<vmem>>) attributes {dimension_semantics = [#tpu.dimension_semantics<parallel>], iteration_bounds = array<i64: 1>, scalar_prefetch = 0 : i64, scratch_operands = 0 : i64, tpu.core_type = #tpu.core_type<tc>, window_params = [{transform_indices = @transform_0, window_bounds = array<i64: 16, 128>}, {pipeline_mode = #tpu.pipeline_mode<synchronous>, transform_indices = @transform_1, window_bounds = array<i64: 128, 128>}, {pipeline_mode = #tpu.pipeline_mode<synchronous>, transform_indices = @transform_2, window_bounds = array<i64: 1, 128>}, {pipeline_mode = #tpu.pipeline_mode<synchronous>, transform_indices = @transform_3, window_bounds = array<i64: 128, 128>}, {pipeline_mode = #tpu.pipeline_mode<synchronous>, transform_indices = @transform_4, window_bounds = array<i64: 128, 128>}, {pipeline_mode = #tpu.pipeline_mode<synchronous>, transform_indices = @transform_5, window_bounds = array<i64: 1, 128>}, {pipeline_mode = #tpu.pipeline_mode<synchronous>, transform_indices = @transform_6, window_bounds = array<i64: 128, 128>}, {pipeline_mode = #tpu.pipeline_mode<synchronous>, transform_indices = @transform_7, window_bounds = array<i64: 128, 128>}, {pipeline_mode = #tpu.pipeline_mode<synchronous>, transform_indices = @transform_8, window_bounds = array<i64: 1, 128>}, {transform_indices = @transform_9, window_bounds = array<i64: 16, 128>}]} {
    %c0 = arith.constant 0 : index
    %c0_0 = arith.constant 0 : index
    %0 = vector.load %arg1[%c0, %c0_0] : memref<16x128xbf16, #tpu.memory_space<vmem>>, vector<16x128xbf16>
    %c0_1 = arith.constant 0 : index
    %c0_2 = arith.constant 0 : index
    %1 = vector.load %arg2[%c0_1, %c0_2] : memref<128x128xbf16, #tpu.memory_space<vmem>>, vector<128x128xbf16>
    %cst = arith.constant dense<0.000000e+00> : vector<16x128xf32>
    %2 = tpu.matmul %0, %1, %cst {dimension_numbers = #tpu.dot_dimension_numbers<[1], [0], [0], [1], [0, 0, 1, 1], [], []>} : vector<16x128xbf16>, vector<128x128xbf16>, vector<16x128xf32> -> vector<16x128xf32>
    %c0_3 = arith.constant 0 : index
    %c0_4 = arith.constant 0 : index
    %3 = vector.load %arg3[%c0_3, %c0_4] : memref<1x128xf32, #tpu.memory_space<vmem>>, vector<1x128xf32>
    %4 = vector.broadcast %3 : vector<1x128xf32> to vector<16x128xf32>
    %5 = arith.addf %2, %4 : vector<16x128xf32>
    %6 = arith.truncf %5 : vector<16x128xf32> to vector<16x128xbf16>
    %c0_5 = arith.constant 0 : index
    %c0_6 = arith.constant 0 : index
    %7 = vector.load %arg4[%c0_5, %c0_6] : memref<128x128xbf16, #tpu.memory_space<vmem>>, vector<128x128xbf16>
    %cst_7 = arith.constant dense<0.000000e+00> : vector<16x128xf32>
    %8 = tpu.matmul %6, %7, %cst_7 {dimension_numbers = #tpu.dot_dimension_numbers<[1], [0], [0], [1], [0, 0, 1, 1], [], []>} : vector<16x128xbf16>, vector<128x128xbf16>, vector<16x128xf32> -> vector<16x128xf32>
    %9 = arith.negf %8 : vector<16x128xf32>
    %10 = math.exp %9 : vector<16x128xf32>
    %cst_8 = arith.constant 1.000000e+00 : f32
    %11 = vector.broadcast %cst_8 : f32 to vector<16x128xf32>
    %12 = arith.addf %11, %10 : vector<16x128xf32>
    %13 = arith.divf %11, %12 : vector<16x128xf32>
    %14 = arith.mulf %13, %5 : vector<16x128xf32>
    %15 = arith.truncf %14 : vector<16x128xf32> to vector<16x128xbf16>
    %c0_9 = arith.constant 0 : index
    %c0_10 = arith.constant 0 : index
    %16 = vector.load %arg5[%c0_9, %c0_10] : memref<128x128xbf16, #tpu.memory_space<vmem>>, vector<128x128xbf16>
    %cst_11 = arith.constant dense<0.000000e+00> : vector<16x128xf32>
    %17 = tpu.matmul %15, %16, %cst_11 {dimension_numbers = #tpu.dot_dimension_numbers<[1], [0], [0], [1], [0, 0, 1, 1], [], []>} : vector<16x128xbf16>, vector<128x128xbf16>, vector<16x128xf32> -> vector<16x128xf32>
    %c0_12 = arith.constant 0 : index
    %c0_13 = arith.constant 0 : index
    %18 = vector.load %arg6[%c0_12, %c0_13] : memref<1x128xf32, #tpu.memory_space<vmem>>, vector<1x128xf32>
    %19 = vector.broadcast %18 : vector<1x128xf32> to vector<16x128xf32>
    %20 = arith.addf %17, %19 : vector<16x128xf32>
    %21 = arith.truncf %20 : vector<16x128xf32> to vector<16x128xbf16>
    %c0_14 = arith.constant 0 : index
    %c0_15 = arith.constant 0 : index
    %22 = vector.load %arg7[%c0_14, %c0_15] : memref<128x128xbf16, #tpu.memory_space<vmem>>, vector<128x128xbf16>
    %cst_16 = arith.constant dense<0.000000e+00> : vector<16x128xf32>
    %23 = tpu.matmul %21, %22, %cst_16 {dimension_numbers = #tpu.dot_dimension_numbers<[1], [0], [0], [1], [0, 0, 1, 1], [], []>} : vector<16x128xbf16>, vector<128x128xbf16>, vector<16x128xf32> -> vector<16x128xf32>
    %24 = arith.negf %23 : vector<16x128xf32>
    %25 = math.exp %24 : vector<16x128xf32>
    %cst_17 = arith.constant 1.000000e+00 : f32
    %26 = vector.broadcast %cst_17 : f32 to vector<16x128xf32>
    %27 = arith.addf %26, %25 : vector<16x128xf32>
    %28 = arith.divf %26, %27 : vector<16x128xf32>
    %29 = arith.mulf %28, %20 : vector<16x128xf32>
    %30 = arith.truncf %29 : vector<16x128xf32> to vector<16x128xbf16>
    %c0_18 = arith.constant 0 : index
    %c0_19 = arith.constant 0 : index
    %31 = vector.load %arg8[%c0_18, %c0_19] : memref<128x128xbf16, #tpu.memory_space<vmem>>, vector<128x128xbf16>
    %cst_20 = arith.constant dense<0.000000e+00> : vector<16x128xf32>
    %32 = tpu.matmul %30, %31, %cst_20 {dimension_numbers = #tpu.dot_dimension_numbers<[1], [0], [0], [1], [0, 0, 1, 1], [], []>} : vector<16x128xbf16>, vector<128x128xbf16>, vector<16x128xf32> -> vector<16x128xf32>
    %c0_21 = arith.constant 0 : index
    %c0_22 = arith.constant 0 : index
    %33 = vector.load %arg9[%c0_21, %c0_22] : memref<1x128xf32, #tpu.memory_space<vmem>>, vector<1x128xf32>
    %34 = vector.broadcast %33 : vector<1x128xf32> to vector<16x128xf32>
    %35 = arith.addf %32, %34 : vector<16x128xf32>
    %c0_23 = arith.constant 0 : index
    %c0_24 = arith.constant 0 : index
    %36 = vector.load %arg10[%c0_23, %c0_24] : memref<16x128xf32, #tpu.memory_space<vmem>>, vector<16x128xf32>
    tpu.vector_store %arg10[%c0_23, %c0_24], %35 {strides = array<i32>} : memref<16x128xf32, #tpu.memory_space<vmem>>, vector<16x128xf32>,
    return
  }
  func.func @transform_0(%arg0: i32) -> (i32, i32) {
    %c0_i32 = arith.constant 0 : i32
    %c0_i32_0 = arith.constant 0 : i32
    return %arg0, %c0_i32 : i32, i32
  }
  func.func @transform_1(%arg0: i32) -> (i32, i32) {
    %c0_i32 = arith.constant 0 : i32
    %c0_i32_0 = arith.constant 0 : i32
    %c0_i32_1 = arith.constant 0 : i32
    return %c0_i32, %c0_i32_0 : i32, i32
  }
  func.func @transform_2(%arg0: i32) -> (i32, i32) {
    %c0_i32 = arith.constant 0 : i32
    %c0_i32_0 = arith.constant 0 : i32
    %c0_i32_1 = arith.constant 0 : i32
    return %c0_i32, %c0_i32_0 : i32, i32
  }
  func.func @transform_3(%arg0: i32) -> (i32, i32) {
    %c0_i32 = arith.constant 0 : i32
    %c0_i32_0 = arith.constant 0 : i32
    %c0_i32_1 = arith.constant 0 : i32
    return %c0_i32, %c0_i32_0 : i32, i32
  }
  func.func @transform_4(%arg0: i32) -> (i32, i32) {
    %c0_i32 = arith.constant 0 : i32
    %c0_i32_0 = arith.constant 0 : i32
    %c0_i32_1 = arith.constant 0 : i32
    return %c0_i32, %c0_i32_0 : i32, i32
  }
  func.func @transform_5(%arg0: i32) -> (i32, i32) {
    %c0_i32 = arith.constant 0 : i32
    %c0_i32_0 = arith.constant 0 : i32
    %c0_i32_1 = arith.constant 0 : i32
    return %c0_i32, %c0_i32_0 : i32, i32
  }
  func.func @transform_6(%arg0: i32) -> (i32, i32) {
    %c0_i32 = arith.constant 0 : i32
    %c0_i32_0 = arith.constant 0 : i32
    %c0_i32_1 = arith.constant 0 : i32
    return %c0_i32, %c0_i32_0 : i32, i32
  }
  func.func @transform_7(%arg0: i32) -> (i32, i32) {
    %c0_i32 = arith.constant 0 : i32
    %c0_i32_0 = arith.constant 0 : i32
    %c0_i32_1 = arith.constant 0 : i32
    return %c0_i32, %c0_i32_0 : i32, i32
  }
  func.func @transform_8(%arg0: i32) -> (i32, i32) {
    %c0_i32 = arith.constant 0 : i32
    %c0_i32_0 = arith.constant 0 : i32
    %c0_i32_1 = arith.constant 0 : i32
    return %c0_i32, %c0_i32_0 : i32, i32
  }
  func.func @transform_9(%arg0: i32) -> (i32, i32) {
    %c0_i32 = arith.constant 0 : i32
    %c0_i32_0 = arith.constant 0 : i32
    return %arg0, %c0_i32 : i32, i32
  }
}

</mosaic_0001>

<llo_original>
// kernel: tpu_custom_call.1
$region0: #{tpu_custom_call.1}
  #allocation0 [shape = 'u32[]', space=smem, size = 0x4, offset = 0x4, fixed_abs, tag = 'smem constant byte address 0x4 - core index']
  #allocation1 [shape = 'u32[144,128]{1,0:T(1,128)}', space=vmem, size = 0x12000, scoped, tag = 'internal scratch']
  %s0 = inlined_call_operand.hbm [shape: bf16[16,128], index: 0, kind: input, shape index: {}]
  %s1 = inlined_call_operand.hbm [shape: bf16[128,128], index: 1, kind: input, shape index: {}]
  %s2 = inlined_call_operand.vmem [shape: f32[1,128], index: 2, kind: input, shape index: {}]
  %s3 = inlined_call_operand.hbm [shape: bf16[128,128], index: 3, kind: input, shape index: {}]
  %s4 = inlined_call_operand.hbm [shape: bf16[128,128], index: 4, kind: input, shape index: {}]
  %s5 = inlined_call_operand.vmem [shape: f32[1,128], index: 5, kind: input, shape index: {}]
  %s6 = inlined_call_operand.hbm [shape: bf16[128,128], index: 6, kind: input, shape index: {}]
  %s7 = inlined_call_operand.hbm [shape: bf16[128,128], index: 7, kind: input, shape index: {}]
  %s8 = inlined_call_operand.vmem [shape: f32[1,128], index: 8, kind: input, shape index: {}]
  %s9 = inlined_call_operand.hbm [shape: f32[16,128], index: 9, kind: output, shape index: {}]
  %s10 = sld [smem:[#allocation0]]
  $region70: #{tpu_custom_call.1} parent=0
    _
  %s12 = ssub.s32 1, %s10
  %s13 = scalar_select 0, %s12, %s10
  $region1: #{tpu_custom_call.1} parent=0
    #allocation2 [shape = 'u8[4096]{0}', space=vmem, size = 0x1000, scoped, tag = 'input window, operand 0, single buffered']
    #allocation3 [shape = 's32[1]{0}', space=sflag, size = 0x4, scoped, tag = 'scoped memory for tpu_custom_call.1']
    #allocation4 [shape = 's32[1]{0}', space=sflag, size = 0x4, scoped, tag = 'scoped memory for tpu_custom_call.1']
    #allocation5 [shape = 'u8[32768]{0}', space=vmem, size = 0x8000, scoped, tag = 'input window, operand 1, single buffered']
    #allocation6 [shape = 's32[1]{0}', space=sflag, size = 0x4, scoped, tag = 'scoped memory for tpu_custom_call.1']
    #allocation7 [shape = 'u8[32768]{0}', space=vmem, size = 0x8000, scoped, tag = 'input window, operand 3, single buffered']
    #allocation8 [shape = 'u8[32768]{0}', space=vmem, size = 0x8000, scoped, tag = 'input window, operand 4, single buffered']
    #allocation9 [shape = 's32[1]{0}', space=sflag, size = 0x4, scoped, tag = 'scoped memory for tpu_custom_call.1']
    #allocation10 [shape = 'u8[32768]{0}', space=vmem, size = 0x8000, scoped, tag = 'input window, operand 6, single buffered']
    #allocation11 [shape = 'u8[32768]{0}', space=vmem, size = 0x8000, scoped, tag = 'input window, operand 7, single buffered']
    #allocation12 [shape = 's32[1]{0}', space=sflag, size = 0x4, scoped, tag = 'scoped memory for tpu_custom_call.1']
    #allocation13 [shape = 'u8[8192]{0}', space=vmem, size = 0x2000, scoped, tag = 'output window, operand 0, single buffered']
    %14 = vsyncpa [#allocation3], 0
    %15 = vsyncpa [#allocation6], 0
    %16 = vsyncpa [#allocation9], 0
    %17 = vsyncpa [#allocation12], 0
    %18 = vsyncpa [#allocation4], 0
    // Predicated region
    $region2: #{tpu_custom_call.1} parent=1 // pred_check
      _
    $region3: #{tpu_custom_call.1} parent=1 // pred_check_branch
      %20 = sbr.rel (0) target = $region5
    $region4: #{tpu_custom_call.1} parent=1 // pred_region
      %s22 = ssub.s32 128, 128
      %23 = vsyncadd [#allocation3], %s22
      %s24 = sshll.u32 [#allocation2], 4
      %s25 = int_to_ptr.vmem [resolvable:$true] %s24
      %30 = dma.hbm_to_vmem [thread:$0]  %s0, 128, %s25, [#allocation3], 64, 64, 4
    $region5: #{tpu_custom_call.1} parent=1 // pred_fallthru
      _
    // Predicated region
    $region6: #{tpu_custom_call.1} parent=1 // pred_check
      _
    $region7: #{tpu_custom_call.1} parent=1 // pred_check_branch
      %32 = sbr.rel (0) target = $region9
    $region8: #{tpu_custom_call.1} parent=1 // pred_region
      %s34 = ssub.s32 1024, 1024
      %35 = vsyncadd [#allocation6], %s34
      %s36 = sshll.u32 [#allocation5], 4
      %s37 = int_to_ptr.vmem [resolvable:$true] %s36
      %42 = dma.hbm_to_vmem [thread:$0]  %s1, 1024, %s37, [#allocation6], 64, 64, 4
    $region9: #{tpu_custom_call.1} parent=1 // pred_fallthru
      _
    // Predicated region
    $region10: #{tpu_custom_call.1} parent=1 // pred_check
      _
    $region11: #{tpu_custom_call.1} parent=1 // pred_check_branch
      %44 = sbr.rel (0) target = $region13
    $region12: #{tpu_custom_call.1} parent=1 // pred_region
      _
    $region13: #{tpu_custom_call.1} parent=1 // pred_fallthru
      _
    // Predicated region
    $region14: #{tpu_custom_call.1} parent=1 // pred_check
      _
    $region15: #{tpu_custom_call.1} parent=1 // pred_check_branch
      %46 = sbr.rel (0) target = $region17
    $region16: #{tpu_custom_call.1} parent=1 // pred_region
      %s48 = ssub.s32 1024, 1024
      %49 = vsyncadd [#allocation6], %s48
      %s50 = sshll.u32 [#allocation7], 4
      %s51 = int_to_ptr.vmem [resolvable:$true] %s50
      %56 = dma.hbm_to_vmem [thread:$0]  %s3, 1024, %s51, [#allocation6], 64, 64, 4
    $region17: #{tpu_custom_call.1} parent=1 // pred_fallthru
      _
    // Predicated region
    $region18: #{tpu_custom_call.1} parent=1 // pred_check
      _
    $region19: #{tpu_custom_call.1} parent=1 // pred_check_branch
      %58 = sbr.rel (0) target = $region21
    $region20: #{tpu_custom_call.1} parent=1 // pred_region
      %s60 = ssub.s32 1024, 1024
      %61 = vsyncadd [#allocation9], %s60
      %s62 = sshll.u32 [#allocation8], 4
      %s63 = int_to_ptr.vmem [resolvable:$true] %s62
      %68 = dma.hbm_to_vmem [thread:$0]  %s4, 1024, %s63, [#allocation9], 64, 64, 4
    $region21: #{tpu_custom_call.1} parent=1 // pred_fallthru
      _
    // Predicated region
    $region22: #{tpu_custom_call.1} parent=1 // pred_check
      _
    $region23: #{tpu_custom_call.1} parent=1 // pred_check_branch
      %70 = sbr.rel (0) target = $region25
    $region24: #{tpu_custom_call.1} parent=1 // pred_region
      _
    $region25: #{tpu_custom_call.1} parent=1 // pred_fallthru
      _
    // Predicated region
    $region26: #{tpu_custom_call.1} parent=1 // pred_check
      _
    $region27: #{tpu_custom_call.1} parent=1 // pred_check_branch
      %72 = sbr.rel (0) target = $region29
    $region28: #{tpu_custom_call.1} parent=1 // pred_region
      %s74 = ssub.s32 1024, 1024
      %75 = vsyncadd [#allocation9], %s74
      %s76 = sshll.u32 [#allocation10], 4
      %s77 = int_to_ptr.vmem [resolvable:$true] %s76
      %82 = dma.hbm_to_vmem [thread:$0]  %s6, 1024, %s77, [#allocation9], 64, 64, 4
    $region29: #{tpu_custom_call.1} parent=1 // pred_fallthru
      _
    // Predicated region
    $region30: #{tpu_custom_call.1} parent=1 // pred_check
      _
    $region31: #{tpu_custom_call.1} parent=1 // pred_check_branch
      %84 = sbr.rel (0) target = $region33
    $region32: #{tpu_custom_call.1} parent=1 // pred_region
      %s86 = ssub.s32 1024, 1024
      %87 = vsyncadd [#allocation12], %s86
      %s88 = sshll.u32 [#allocation11], 4
      %s89 = int_to_ptr.vmem [resolvable:$true] %s88
      %94 = dma.hbm_to_vmem [thread:$0]  %s7, 1024, %s89, [#allocation12], 64, 64, 4
    $region33: #{tpu_custom_call.1} parent=1 // pred_fallthru
      _
    // Predicated region
    $region34: #{tpu_custom_call.1} parent=1 // pred_check
      _
    $region35: #{tpu_custom_call.1} parent=1 // pred_check_branch
      %96 = sbr.rel (0) target = $region37
    $region36: #{tpu_custom_call.1} parent=1 // pred_region
      _
    $region37: #{tpu_custom_call.1} parent=1 // pred_fallthru
      _
    // Predicated region
    $region38: #{tpu_custom_call.1} parent=1 // pred_check
      _
    $region39: #{tpu_custom_call.1} parent=1 // pred_check_branch
      %98 = sbr.rel (0) target = $region41
    $region40: #{tpu_custom_call.1} parent=1 // pred_region
      %99 = dma.done [#allocation3], 128
    $region41: #{tpu_custom_call.1} parent=1 // pred_fallthru
      _
    // Predicated region
    $region42: #{tpu_custom_call.1} parent=1 // pred_check
      _
    $region43: #{tpu_custom_call.1} parent=1 // pred_check_branch
      %101 = sbr.rel (0) target = $region45
    $region44: #{tpu_custom_call.1} parent=1 // pred_region
      %102 = dma.done [#allocation6], 1024
    $region45: #{tpu_custom_call.1} parent=1 // pred_fallthru
      _
    // Predicated region
    $region46: #{tpu_custom_call.1} parent=1 // pred_check
      _
    $region47: #{tpu_custom_call.1} parent=1 // pred_check_branch
      %104 = sbr.rel (0) target = $region49
    $region48: #{tpu_custom_call.1} parent=1 // pred_region
      %105 = dma.done [#allocation6], 1024
    $region49: #{tpu_custom_call.1} parent=1 // pred_fallthru
      _
    // Predicated region
    $region50: #{tpu_custom_call.1} parent=1 // pred_check
      _
    $region51: #{tpu_custom_call.1} parent=1 // pred_check_branch
      %107 = sbr.rel (0) target = $region53
    $region52: #{tpu_custom_call.1} parent=1 // pred_region
      %108 = dma.done [#allocation9], 1024
    $region53: #{tpu_custom_call.1} parent=1 // pred_fallthru
      _
    // Predicated region
    $region54: #{tpu_custom_call.1} parent=1 // pred_check
      _
    $region55: #{tpu_custom_call.1} parent=1 // pred_check_branch
      %110 = sbr.rel (0) target = $region57
    $region56: #{tpu_custom_call.1} parent=1 // pred_region
      %111 = dma.done [#allocation9], 1024
    $region57: #{tpu_custom_call.1} parent=1 // pred_fallthru
      _
    // Predicated region
    $region58: #{tpu_custom_call.1} parent=1 // pred_check
      _
    $region59: #{tpu_custom_call.1} parent=1 // pred_check_branch
      %113 = sbr.rel (0) target = $region61
    $region60: #{tpu_custom_call.1} parent=1 // pred_region
      %114 = dma.done [#allocation12], 1024
    $region61: #{tpu_custom_call.1} parent=1 // pred_fallthru
      _
    %v116 = vld [vmem:[#allocation2] sm:$0xf]
    %v117 = vld [vmem:[#allocation2 + $0x4] sm:$0xf]
    %v118 = vld [vmem:[#allocation5] sm:$0xf]
    %v119 = vld [vmem:[#allocation5 + $0x4] sm:$0xf]
    %v120 = vld [vmem:[#allocation5 + $0x8] sm:$0xf]
    %v121 = vld [vmem:[#allocation5 + $0xc] sm:$0xf]
    %v122 = vld [vmem:[#allocation5 + $0x10] sm:$0xf]
    %v123 = vld [vmem:[#allocation5 + $0x14] sm:$0xf]
    %v124 = vld [vmem:[#allocation5 + $0x18] sm:$0xf]
    %v125 = vld [vmem:[#allocation5 + $0x1c] sm:$0xf]
    %v126 = vld [vmem:[#allocation5 + $0x20] sm:$0xf]
    %v127 = vld [vmem:[#allocation5 + $0x24] sm:$0xf]
    %v128 = vld [vmem:[#allocation5 + $0x28] sm:$0xf]
    %v129 = vld [vmem:[#allocation5 + $0x2c] sm:$0xf]
    %v130 = vld [vmem:[#allocation5 + $0x30] sm:$0xf]
    %v131 = vld [vmem:[#allocation5 + $0x34] sm:$0xf]
    %v132 = vld [vmem:[#allocation5 + $0x38] sm:$0xf]
    %v133 = vld [vmem:[#allocation5 + $0x3c] sm:$0xf]
    %v134 = vld [vmem:[%s2] sm:$0x1]
    %v136 = vlaneseq
    %v137 = vshrl.u32 %v136, 7
    %v138 = vsub.s32 0, %v137
    %v139 = vrot.slane %v134, %v138
    %v143 = vunpack.c.l.b16 %v116
    %v144 = vunpack.c.l.b16 %v117
    %v145 = vpack.c.b16 %v144, %v143
    %v163 = vunpack.c.l.b16 %v118
    %v164 = vunpack.c.l.b16 %v119
    %v165 = vunpack.c.l.b16 %v120
    %v166 = vunpack.c.l.b16 %v121
    %v167 = vunpack.c.l.b16 %v122
    %v168 = vunpack.c.l.b16 %v123
    %v169 = vunpack.c.l.b16 %v124
    %v170 = vunpack.c.l.b16 %v125
    %v171 = vunpack.c.l.b16 %v126
    %v172 = vunpack.c.l.b16 %v127
    %v173 = vunpack.c.l.b16 %v128
    %v174 = vunpack.c.l.b16 %v129
    %v175 = vunpack.c.l.b16 %v130
    %v176 = vunpack.c.l.b16 %v131
    %v177 = vunpack.c.l.b16 %v132
    %v178 = vunpack.c.l.b16 %v133
    %v179 = vpack.c.b16 %v164, %v163
    %v180 = vpack.c.b16 %v166, %v165
    %v181 = vpack.c.b16 %v168, %v167
    %v182 = vpack.c.b16 %v170, %v169
    %v183 = vpack.c.b16 %v172, %v171
    %v184 = vpack.c.b16 %v174, %v173
    %v185 = vpack.c.b16 %v176, %v175
    %v186 = vpack.c.b16 %v178, %v177
    %195 = vmatprep.subr.bf16.mxu0 0
    %196 = vmatpush1.bf16.msra.mxu0 %v179
    %197 = vmatprep.subr.bf16.mxu0 0
    %198 = vmatpush1.bf16.msra.mxu0 %v180
    %199 = vmatprep.subr.bf16.mxu0 0
    %200 = vmatpush1.bf16.msra.mxu0 %v181
    %201 = vmatprep.subr.bf16.mxu0 0
    %202 = vmatpush1.bf16.msra.mxu0 %v182
    %203 = vmatprep.subr.bf16.mxu0 0
    %204 = vmatpush1.bf16.msra.mxu0 %v183
    %205 = vmatprep.subr.bf16.mxu0 0
    %206 = vmatpush1.bf16.msra.mxu0 %v184
    %207 = vmatprep.subr.bf16.mxu0 0
    %208 = vmatpush1.bf16.msra.mxu0 %v185
    %209 = vmatprep.subr.bf16.mxu0 0
    %210 = vmatpush1.bf16.msra.mxu0 %v186
    %211 = vmatprep.subr.bf16.mxu0 0
    %212 = vmatpush1.bf16.msra.mxu0 0
    %213 = vmatprep.subr.bf16.mxu0 0
    %214 = vmatpush1.bf16.msra.mxu0 0
    %215 = vmatprep.subr.bf16.mxu0 0
    %216 = vmatpush1.bf16.msra.mxu0 0
    %217 = vmatprep.subr.bf16.mxu0 0
    %218 = vmatpush1.bf16.msra.mxu0 0
    %219 = vmatprep.subr.bf16.mxu0 0
    %220 = vmatpush1.bf16.msra.mxu0 0
    %221 = vmatprep.subr.bf16.mxu0 0
    %222 = vmatpush1.bf16.msra.mxu0 0
    %223 = vmatprep.subr.bf16.mxu0 0
    %224 = vmatpush1.bf16.msra.mxu0 0
    %225 = vmatprep.subr.bf16.mxu0 0
    %226 = vmatpush1.bf16.msra.mxu0 0
    %227 = vmatprep.mubr.bf16.mxu0 0
    %228 = vmatmul.mubr.bf16.gmra.mrb[0].mxu0 %v145
    %v229 = vpop.f32.mrb[0].mxu0
    %v230 = vadd.f32 %v139, %v229
    %v231 = vpop.f32.mrb[0].mxu0
    %v232 = vpop.f32.mrb[0].mxu0
    %v233 = vadd.f32 %v139, %v232
    %v234 = vpop.f32.mrb[0].mxu0
    %235 = vdwg.mxu0
    %v236 = vpack.c.bf16 %v233, %v230
    %v237 = vld [vmem:[#allocation7] sm:$0xf]
    %v238 = vld [vmem:[#allocation7 + $0x4] sm:$0xf]
    %v239 = vld [vmem:[#allocation7 + $0x8] sm:$0xf]
    %v240 = vld [vmem:[#allocation7 + $0xc] sm:$0xf]
    %v241 = vld [vmem:[#allocation7 + $0x10] sm:$0xf]
    %v242 = vld [vmem:[#allocation7 + $0x14] sm:$0xf]
    %v243 = vld [vmem:[#allocation7 + $0x18] sm:$0xf]
    %v244 = vld [vmem:[#allocation7 + $0x1c] sm:$0xf]
    %v245 = vld [vmem:[#allocation7 + $0x20] sm:$0xf]
    %v246 = vld [vmem:[#allocation7 + $0x24] sm:$0xf]
    %v247 = vld [vmem:[#allocation7 + $0x28] sm:$0xf]
    %v248 = vld [vmem:[#allocation7 + $0x2c] sm:$0xf]
    %v249 = vld [vmem:[#allocation7 + $0x30] sm:$0xf]
    %v250 = vld [vmem:[#allocation7 + $0x34] sm:$0xf]
    %v251 = vld [vmem:[#allocation7 + $0x38] sm:$0xf]
    %v252 = vld [vmem:[#allocation7 + $0x3c] sm:$0xf]
    %v269 = vunpack.c.l.b16 %v237
    %v270 = vunpack.c.l.b16 %v238
    %v271 = vunpack.c.l.b16 %v239
    %v272 = vunpack.c.l.b16 %v240
    %v273 = vunpack.c.l.b16 %v241
    %v274 = vunpack.c.l.b16 %v242
    %v275 = vunpack.c.l.b16 %v243
    %v276 = vunpack.c.l.b16 %v244
    %v277 = vunpack.c.l.b16 %v245
    %v278 = vunpack.c.l.b16 %v246
    %v279 = vunpack.c.l.b16 %v247
    %v280 = vunpack.c.l.b16 %v248
    %v281 = vunpack.c.l.b16 %v249
    %v282 = vunpack.c.l.b16 %v250
    %v283 = vunpack.c.l.b16 %v251
    %v284 = vunpack.c.l.b16 %v252
    %v285 = vpack.c.b16 %v270, %v269
    %v286 = vpack.c.b16 %v272, %v271
    %v287 = vpack.c.b16 %v274, %v273
    %v288 = vpack.c.b16 %v276, %v275
    %v289 = vpack.c.b16 %v278, %v277
    %v290 = vpack.c.b16 %v280, %v279
    %v291 = vpack.c.b16 %v282, %v281
    %v292 = vpack.c.b16 %v284, %v283
    %301 = vmatprep.subr.bf16.mxu0 0
    %302 = vmatpush1.bf16.msra.mxu0 %v285
    %303 = vmatprep.subr.bf16.mxu0 0
    %304 = vmatpush1.bf16.msra.mxu0 %v286
    %305 = vmatprep.subr.bf16.mxu0 0
    %306 = vmatpush1.bf16.msra.mxu0 %v287
    %307 = vmatprep.subr.bf16.mxu0 0
    %308 = vmatpush1.bf16.msra.mxu0 %v288
    %309 = vmatprep.subr.bf16.mxu0 0
    %310 = vmatpush1.bf16.msra.mxu0 %v289
    %311 = vmatprep.subr.bf16.mxu0 0
    %312 = vmatpush1.bf16.msra.mxu0 %v290
    %313 = vmatprep.subr.bf16.mxu0 0
    %314 = vmatpush1.bf16.msra.mxu0 %v291
    %315 = vmatprep.subr.bf16.mxu0 0
    %316 = vmatpush1.bf16.msra.mxu0 %v292
    %317 = vmatprep.subr.bf16.mxu0 0
    %318 = vmatpush1.bf16.msra.mxu0 0
    %319 = vmatprep.subr.bf16.mxu0 0
    %320 = vmatpush1.bf16.msra.mxu0 0
    %321 = vmatprep.subr.bf16.mxu0 0
    %322 = vmatpush1.bf16.msra.mxu0 0
    %323 = vmatprep.subr.bf16.mxu0 0
    %324 = vmatpush1.bf16.msra.mxu0 0
    %325 = vmatprep.subr.bf16.mxu0 0
    %326 = vmatpush1.bf16.msra.mxu0 0
    %327 = vmatprep.subr.bf16.mxu0 0
    %328 = vmatpush1.bf16.msra.mxu0 0
    %329 = vmatprep.subr.bf16.mxu0 0
    %330 = vmatpush1.bf16.msra.mxu0 0
    %331 = vmatprep.subr.bf16.mxu0 0
    %332 = vmatpush1.bf16.msra.mxu0 0
    %333 = vmatprep.mubr.bf16.mxu0 0
    %334 = vmatmul.mubr.bf16.gmra.mrb[0].mxu0 %v236
    %v335 = vpop.f32.mrb[0].mxu0
    %v336 = vadd.f32 0.0, %v335
    %v337 = vpop.f32.mrb[0].mxu0
    %v338 = vpop.f32.mrb[0].mxu0
    %v339 = vadd.f32 0.0, %v338
    %v340 = vpop.f32.mrb[0].mxu0
    %341 = vdwg.mxu0
    %v342 = vxor.u32 %v336, 2147483648
    %v343 = vxor.u32 %v339, 2147483648
    %v344 = vmul.f32 %v342, 1.442695
    %v345 = vpow.pop %v344
    %v346 = vmul.f32 %v343, 1.442695
    %v347 = vpow.pop %v346
    %v348 = vadd.f32 %v345, 1.0
    %v349 = vadd.f32 %v347, 1.0
    %v350 = vrcp.pop %v348
    %v351 = vmul.f32 1.0, %v350
    %v352 = vrcp.pop %v349
    %v353 = vmul.f32 1.0, %v352
    %v354 = vmul.f32 %v351, %v230
    %v355 = vmul.f32 %v353, %v233
    %v356 = vpack.c.bf16 %v355, %v354
    %v357 = vld [vmem:[#allocation8] sm:$0xf]
    %v358 = vld [vmem:[#allocation8 + $0x4] sm:$0xf]
    %v359 = vld [vmem:[#allocation8 + $0x8] sm:$0xf]
    %v360 = vld [vmem:[#allocation8 + $0xc] sm:$0xf]
    %v361 = vld [vmem:[#allocation8 + $0x10] sm:$0xf]
    %v362 = vld [vmem:[#allocation8 + $0x14] sm:$0xf]
    %v363 = vld [vmem:[#allocation8 + $0x18] sm:$0xf]
    %v364 = vld [vmem:[#allocation8 + $0x1c] sm:$0xf]
    %v365 = vld [vmem:[#allocation8 + $0x20] sm:$0xf]
    %v366 = vld [vmem:[#allocation8 + $0x24] sm:$0xf]
    %v367 = vld [vmem:[#allocation8 + $0x28] sm:$0xf]
    %v368 = vld [vmem:[#allocation8 + $0x2c] sm:$0xf]
    %v369 = vld [vmem:[#allocation8 + $0x30] sm:$0xf]
    %v370 = vld [vmem:[#allocation8 + $0x34] sm:$0xf]
    %v371 = vld [vmem:[#allocation8 + $0x38] sm:$0xf]
    %v372 = vld [vmem:[#allocation8 + $0x3c] sm:$0xf]
    %v373 = vld [vmem:[%s5] sm:$0x1]
    %v375 = vlaneseq
    %v376 = vshrl.u32 %v375, 7
    %v377 = vsub.s32 0, %v376
    %v378 = vrot.slane %v373, %v377
    %v396 = vunpack.c.l.b16 %v357
    %v397 = vunpack.c.l.b16 %v358
    %v398 = vunpack.c.l.b16 %v359
    %v399 = vunpack.c.l.b16 %v360
    %v400 = vunpack.c.l.b16 %v361
    %v401 = vunpack.c.l.b16 %v362
    %v402 = vunpack.c.l.b16 %v363
    %v403 = vunpack.c.l.b16 %v364
    %v404 = vunpack.c.l.b16 %v365
    %v405 = vunpack.c.l.b16 %v366
    %v406 = vunpack.c.l.b16 %v367
    %v407 = vunpack.c.l.b16 %v368
    %v408 = vunpack.c.l.b16 %v369
    %v409 = vunpack.c.l.b16 %v370
    %v410 = vunpack.c.l.b16 %v371
    %v411 = vunpack.c.l.b16 %v372
    %v412 = vpack.c.b16 %v397, %v396
    %v413 = vpack.c.b16 %v399, %v398
    %v414 = vpack.c.b16 %v401, %v400
    %v415 = vpack.c.b16 %v403, %v402
    %v416 = vpack.c.b16 %v405, %v404
    %v417 = vpack.c.b16 %v407, %v406
    %v418 = vpack.c.b16 %v409, %v408
    %v419 = vpack.c.b16 %v411, %v410
    %428 = vmatprep.subr.bf16.mxu0 0
    %429 = vmatpush1.bf16.msra.mxu0 %v412
    %430 = vmatprep.subr.bf16.mxu0 0
    %431 = vmatpush1.bf16.msra.mxu0 %v413
    %432 = vmatprep.subr.bf16.mxu0 0
    %433 = vmatpush1.bf16.msra.mxu0 %v414
    %434 = vmatprep.subr.bf16.mxu0 0
    %435 = vmatpush1.bf16.msra.mxu0 %v415
    %436 = vmatprep.subr.bf16.mxu0 0
    %437 = vmatpush1.bf16.msra.mxu0 %v416
    %438 = vmatprep.subr.bf16.mxu0 0
    %439 = vmatpush1.bf16.msra.mxu0 %v417
    %440 = vmatprep.subr.bf16.mxu0 0
    %441 = vmatpush1.bf16.msra.mxu0 %v418
    %442 = vmatprep.subr.bf16.mxu0 0
    %443 = vmatpush1.bf16.msra.mxu0 %v419
    %444 = vmatprep.subr.bf16.mxu0 0
    %445 = vmatpush1.bf16.msra.mxu0 0
    %446 = vmatprep.subr.bf16.mxu0 0
    %447 = vmatpush1.bf16.msra.mxu0 0
    %448 = vmatprep.subr.bf16.mxu0 0
    %449 = vmatpush1.bf16.msra.mxu0 0
    %450 = vmatprep.subr.bf16.mxu0 0
    %451 = vmatpush1.bf16.msra.mxu0 0
    %452 = vmatprep.subr.bf16.mxu0 0
    %453 = vmatpush1.bf16.msra.mxu0 0
    %454 = vmatprep.subr.bf16.mxu0 0
    %455 = vmatpush1.bf16.msra.mxu0 0
    %456 = vmatprep.subr.bf16.mxu0 0
    %457 = vmatpush1.bf16.msra.mxu0 0
    %458 = vmatprep.subr.bf16.mxu0 0
    %459 = vmatpush1.bf16.msra.mxu0 0
    %460 = vmatprep.mubr.bf16.mxu0 0
    %461 = vmatmul.mubr.bf16.gmra.mrb[0].mxu0 %v356
    %v462 = vpop.f32.mrb[0].mxu0
    %v463 = vadd.f32 %v378, %v462
    %v464 = vpop.f32.mrb[0].mxu0
    %v465 = vpop.f32.mrb[0].mxu0
    %v466 = vadd.f32 %v378, %v465
    %v467 = vpop.f32.mrb[0].mxu0
    %468 = vdwg.mxu0
    %v469 = vpack.c.bf16 %v466, %v463
    %v470 = vld [vmem:[#allocation10] sm:$0xf]
    %v471 = vld [vmem:[#allocation10 + $0x4] sm:$0xf]
    %v472 = vld [vmem:[#allocation10 + $0x8] sm:$0xf]
    %v473 = vld [vmem:[#allocation10 + $0xc] sm:$0xf]
    %v474 = vld [vmem:[#allocation10 + $0x10] sm:$0xf]
    %v475 = vld [vmem:[#allocation10 + $0x14] sm:$0xf]
    %v476 = vld [vmem:[#allocation10 + $0x18] sm:$0xf]
    %v477 = vld [vmem:[#allocation10 + $0x1c] sm:$0xf]
    %v478 = vld [vmem:[#allocation10 + $0x20] sm:$0xf]
    %v479 = vld [vmem:[#allocation10 + $0x24] sm:$0xf]
    %v480 = vld [vmem:[#allocation10 + $0x28] sm:$0xf]
    %v481 = vld [vmem:[#allocation10 + $0x2c] sm:$0xf]
    %v482 = vld [vmem:[#allocation10 + $0x30] sm:$0xf]
    %v483 = vld [vmem:[#allocation10 + $0x34] sm:$0xf]
    %v484 = vld [vmem:[#allocation10 + $0x38] sm:$0xf]
    %v485 = vld [vmem:[#allocation10 + $0x3c] sm:$0xf]
    %v502 = vunpack.c.l.b16 %v470
    %v503 = vunpack.c.l.b16 %v471
    %v504 = vunpack.c.l.b16 %v472
    %v505 = vunpack.c.l.b16 %v473
    %v506 = vunpack.c.l.b16 %v474
    %v507 = vunpack.c.l.b16 %v475
    %v508 = vunpack.c.l.b16 %v476
    %v509 = vunpack.c.l.b16 %v477
    %v510 = vunpack.c.l.b16 %v478
    %v511 = vunpack.c.l.b16 %v479
    %v512 = vunpack.c.l.b16 %v480
    %v513 = vunpack.c.l.b16 %v481
    %v514 = vunpack.c.l.b16 %v482
    %v515 = vunpack.c.l.b16 %v483
    %v516 = vunpack.c.l.b16 %v484
    %v517 = vunpack.c.l.b16 %v485
    %v518 = vpack.c.b16 %v503, %v502
    %v519 = vpack.c.b16 %v505, %v504
    %v520 = vpack.c.b16 %v507, %v506
    %v521 = vpack.c.b16 %v509, %v508
    %v522 = vpack.c.b16 %v511, %v510
    %v523 = vpack.c.b16 %v513, %v512
    %v524 = vpack.c.b16 %v515, %v514
    %v525 = vpack.c.b16 %v517, %v516
    %534 = vmatprep.subr.bf16.mxu0 0
    %535 = vmatpush1.bf16.msra.mxu0 %v518
    %536 = vmatprep.subr.bf16.mxu0 0
    %537 = vmatpush1.bf16.msra.mxu0 %v519
    %538 = vmatprep.subr.bf16.mxu0 0
    %539 = vmatpush1.bf16.msra.mxu0 %v520
    %540 = vmatprep.subr.bf16.mxu0 0
    %541 = vmatpush1.bf16.msra.mxu0 %v521
    %542 = vmatprep.subr.bf16.mxu0 0
    %543 = vmatpush1.bf16.msra.mxu0 %v522
    %544 = vmatprep.subr.bf16.mxu0 0
    %545 = vmatpush1.bf16.msra.mxu0 %v523
    %546 = vmatprep.subr.bf16.mxu0 0
    %547 = vmatpush1.bf16.msra.mxu0 %v524
    %548 = vmatprep.subr.bf16.mxu0 0
    %549 = vmatpush1.bf16.msra.mxu0 %v525
    %550 = vmatprep.subr.bf16.mxu0 0
    %551 = vmatpush1.bf16.msra.mxu0 0
    %552 = vmatprep.subr.bf16.mxu0 0
    %553 = vmatpush1.bf16.msra.mxu0 0
    %554 = vmatprep.subr.bf16.mxu0 0
    %555 = vmatpush1.bf16.msra.mxu0 0
    %556 = vmatprep.subr.bf16.mxu0 0
    %557 = vmatpush1.bf16.msra.mxu0 0
    %558 = vmatprep.subr.bf16.mxu0 0
    %559 = vmatpush1.bf16.msra.mxu0 0
    %560 = vmatprep.subr.bf16.mxu0 0
    %561 = vmatpush1.bf16.msra.mxu0 0
    %562 = vmatprep.subr.bf16.mxu0 0
    %563 = vmatpush1.bf16.msra.mxu0 0
    %564 = vmatprep.subr.bf16.mxu0 0
    %565 = vmatpush1.bf16.msra.mxu0 0
    %566 = vmatprep.mubr.bf16.mxu0 0
    %567 = vmatmul.mubr.bf16.gmra.mrb[0].mxu0 %v469
    %v568 = vpop.f32.mrb[0].mxu0
    %v569 = vadd.f32 0.0, %v568
    %v570 = vpop.f32.mrb[0].mxu0
    %v571 = vpop.f32.mrb[0].mxu0
    %v572 = vadd.f32 0.0, %v571
    %v573 = vpop.f32.mrb[0].mxu0
    %574 = vdwg.mxu0
    %v575 = vxor.u32 %v569, 2147483648
    %v576 = vxor.u32 %v572, 2147483648
    %v577 = vmul.f32 %v575, 1.442695
    %v578 = vpow.pop %v577
    %v579 = vmul.f32 %v576, 1.442695
    %v580 = vpow.pop %v579
    %v581 = vadd.f32 %v578, 1.0
    %v582 = vadd.f32 %v580, 1.0
    %v583 = vrcp.pop %v581
    %v584 = vmul.f32 1.0, %v583
    %v585 = vrcp.pop %v582
    %v586 = vmul.f32 1.0, %v585
    %v587 = vmul.f32 %v584, %v463
    %v588 = vmul.f32 %v586, %v466
    %v589 = vpack.c.bf16 %v588, %v587
    %v590 = vld [vmem:[#allocation11] sm:$0xf]
    %v591 = vld [vmem:[#allocation11 + $0x4] sm:$0xf]
    %v592 = vld [vmem:[#allocation11 + $0x8] sm:$0xf]
    %v593 = vld [vmem:[#allocation11 + $0xc] sm:$0xf]
    %v594 = vld [vmem:[#allocation11 + $0x10] sm:$0xf]
    %v595 = vld [vmem:[#allocation11 + $0x14] sm:$0xf]
    %v596 = vld [vmem:[#allocation11 + $0x18] sm:$0xf]
    %v597 = vld [vmem:[#allocation11 + $0x1c] sm:$0xf]
    %v598 = vld [vmem:[#allocation11 + $0x20] sm:$0xf]
    %v599 = vld [vmem:[#allocation11 + $0x24] sm:$0xf]
    %v600 = vld [vmem:[#allocation11 + $0x28] sm:$0xf]
    %v601 = vld [vmem:[#allocation11 + $0x2c] sm:$0xf]
    %v602 = vld [vmem:[#allocation11 + $0x30] sm:$0xf]
    %v603 = vld [vmem:[#allocation11 + $0x34] sm:$0xf]
    %v604 = vld [vmem:[#allocation11 + $0x38] sm:$0xf]
    %v605 = vld [vmem:[#allocation11 + $0x3c] sm:$0xf]
    %v606 = vld [vmem:[%s8] sm:$0x1]
    %v608 = vlaneseq
    %v609 = vshrl.u32 %v608, 7
    %v610 = vsub.s32 0, %v609
    %v611 = vrot.slane %v606, %v610
    %v629 = vunpack.c.l.b16 %v590
    %v630 = vunpack.c.l.b16 %v591
    %v631 = vunpack.c.l.b16 %v592
    %v632 = vunpack.c.l.b16 %v593
    %v633 = vunpack.c.l.b16 %v594
    %v634 = vunpack.c.l.b16 %v595
    %v635 = vunpack.c.l.b16 %v596
    %v636 = vunpack.c.l.b16 %v597
    %v637 = vunpack.c.l.b16 %v598
    %v638 = vunpack.c.l.b16 %v599
    %v639 = vunpack.c.l.b16 %v600
    %v640 = vunpack.c.l.b16 %v601
    %v641 = vunpack.c.l.b16 %v602
    %v642 = vunpack.c.l.b16 %v603
    %v643 = vunpack.c.l.b16 %v604
    %v644 = vunpack.c.l.b16 %v605
    %v645 = vpack.c.b16 %v630, %v629
    %v646 = vpack.c.b16 %v632, %v631
    %v647 = vpack.c.b16 %v634, %v633
    %v648 = vpack.c.b16 %v636, %v635
    %v649 = vpack.c.b16 %v638, %v637
    %v650 = vpack.c.b16 %v640, %v639
    %v651 = vpack.c.b16 %v642, %v641
    %v652 = vpack.c.b16 %v644, %v643
    %661 = vmatprep.subr.bf16.mxu0 0
    %662 = vmatpush1.bf16.msra.mxu0 %v645
    %663 = vmatprep.subr.bf16.mxu0 0
    %664 = vmatpush1.bf16.msra.mxu0 %v646
    %665 = vmatprep.subr.bf16.mxu0 0
    %666 = vmatpush1.bf16.msra.mxu0 %v647
    %667 = vmatprep.subr.bf16.mxu0 0
    %668 = vmatpush1.bf16.msra.mxu0 %v648
    %669 = vmatprep.subr.bf16.mxu0 0
    %670 = vmatpush1.bf16.msra.mxu0 %v649
    %671 = vmatprep.subr.bf16.mxu0 0
    %672 = vmatpush1.bf16.msra.mxu0 %v650
    %673 = vmatprep.subr.bf16.mxu0 0
    %674 = vmatpush1.bf16.msra.mxu0 %v651
    %675 = vmatprep.subr.bf16.mxu0 0
    %676 = vmatpush1.bf16.msra.mxu0 %v652
    %677 = vmatprep.subr.bf16.mxu0 0
    %678 = vmatpush1.bf16.msra.mxu0 0
    %679 = vmatprep.subr.bf16.mxu0 0
    %680 = vmatpush1.bf16.msra.mxu0 0
    %681 = vmatprep.subr.bf16.mxu0 0
    %682 = vmatpush1.bf16.msra.mxu0 0
    %683 = vmatprep.subr.bf16.mxu0 0
    %684 = vmatpush1.bf16.msra.mxu0 0
    %685 = vmatprep.subr.bf16.mxu0 0
    %686 = vmatpush1.bf16.msra.mxu0 0
    %687 = vmatprep.subr.bf16.mxu0 0
    %688 = vmatpush1.bf16.msra.mxu0 0
    %689 = vmatprep.subr.bf16.mxu0 0
    %690 = vmatpush1.bf16.msra.mxu0 0
    %691 = vmatprep.subr.bf16.mxu0 0
    %692 = vmatpush1.bf16.msra.mxu0 0
    %693 = vmatprep.mubr.bf16.mxu0 0
    %694 = vmatmul.mubr.bf16.gmra.mrb[0].mxu0 %v589
    %v695 = vpop.f32.mrb[0].mxu0
    %v696 = vadd.f32 %v611, %v695
    %v697 = vpop.f32.mrb[0].mxu0
    %v698 = vpop.f32.mrb[0].mxu0
    %v699 = vadd.f32 %v611, %v698
    %v700 = vpop.f32.mrb[0].mxu0
    %701 = vdwg.mxu0
    %702 = vst [vmem:[#allocation13] sm:$0xff] %v696
    %703 = vst [vmem:[#allocation13 + $0x8] sm:$0xff] %v699
    // Predicated region
    $region62: #{tpu_custom_call.1} parent=1 // pred_check
      _
    $region63: #{tpu_custom_call.1} parent=1 // pred_check_branch
      %705 = sbr.rel (0) target = $region65
    $region64: #{tpu_custom_call.1} parent=1 // pred_region
      %s707 = ssub.s32 256, 256
      %708 = vsyncadd [#allocation4], %s707
      %s709 = sshll.u32 [#allocation13], 4
      %s710 = int_to_ptr.vmem [resolvable:$true] %s709
      %715 = dma.vmem_to_hbm [thread:$0]  %s710, 256, %s9, [#allocation4], 128, 128, 8
    $region65: #{tpu_custom_call.1} parent=1 // pred_fallthru
      _
    // Predicated region
    $region66: #{tpu_custom_call.1} parent=1 // pred_check
      _
    $region67: #{tpu_custom_call.1} parent=1 // pred_check_branch
      %717 = sbr.rel (0) target = $region69
    $region68: #{tpu_custom_call.1} parent=1 // pred_region
      %718 = dma.done [#allocation4], 256
    $region69: #{tpu_custom_call.1} parent=1 // pred_fallthru
      _
    %719 = vsyncpa [#allocation3], 1
    %720 = vsyncpa [#allocation6], 1
    %721 = vsyncpa [#allocation9], 1
    %722 = vsyncpa [#allocation12], 1
    %723 = vsyncpa [#allocation4], 1

// kernel: tpu_custom_call.1
$region0: #{tpu_custom_call.1}
  #allocation0 [shape = 'u32[]', space=smem, size = 0x4, offset = 0x4, fixed_abs, tag = 'smem constant byte address 0x4 - core index']
  #allocation1 [shape = 'u32[144,128]{1,0:T(1,128)}', space=vmem, size = 0x12000, scoped, tag = 'internal scratch']
  %s0 = inlined_call_operand.hbm [shape: bf16[16,128], index: 0, kind: input, shape index: {}]
  %s1 = inlined_call_operand.hbm [shape: bf16[128,128], index: 1, kind: input, shape index: {}]
  %s2 = inlined_call_operand.vmem [shape: f32[1,128], index: 2, kind: input, shape index: {}]
  %s3 = inlined_call_operand.hbm [shape: bf16[128,128], index: 3, kind: input, shape index: {}]
  %s4 = inlined_call_operand.hbm [shape: bf16[128,128], index: 4, kind: input, shape index: {}]
  %s5 = inlined_call_operand.vmem [shape: f32[1,128], index: 5, kind: input, shape index: {}]
  %s6 = inlined_call_operand.hbm [shape: bf16[128,128], index: 6, kind: input, shape index: {}]
  %s7 = inlined_call_operand.hbm [shape: bf16[128,128], index: 7, kind: input, shape index: {}]
  %s8 = inlined_call_operand.vmem [shape: f32[1,128], index: 8, kind: input, shape index: {}]
  %s9 = inlined_call_operand.hbm [shape: f32[16,128], index: 9, kind: output, shape index: {}]
  %s10 = sld [smem:[#allocation0]]
  $region70: #{tpu_custom_call.1} parent=0
    _
  %s12 = ssub.s32 1, %s10
  %s13 = scalar_select 0, %s12, %s10
  $region1: #{tpu_custom_call.1} parent=0
    #allocation2 [shape = 'u8[4096]{0}', space=vmem, size = 0x1000, scoped, tag = 'input window, operand 0, single buffered']
    #allocation3 [shape = 's32[1]{0}', space=sflag, size = 0x4, scoped, tag = 'scoped memory for tpu_custom_call.1']
    #allocation4 [shape = 's32[1]{0}', space=sflag, size = 0x4, scoped, tag = 'scoped memory for tpu_custom_call.1']
    #allocation5 [shape = 'u8[32768]{0}', space=vmem, size = 0x8000, scoped, tag = 'input window, operand 1, single buffered']
    #allocation6 [shape = 's32[1]{0}', space=sflag, size = 0x4, scoped, tag = 'scoped memory for tpu_custom_call.1']
    #allocation7 [shape = 'u8[32768]{0}', space=vmem, size = 0x8000, scoped, tag = 'input window, operand 3, single buffered']
    #allocation8 [shape = 'u8[32768]{0}', space=vmem, size = 0x8000, scoped, tag = 'input window, operand 4, single buffered']
    #allocation9 [shape = 's32[1]{0}', space=sflag, size = 0x4, scoped, tag = 'scoped memory for tpu_custom_call.1']
    #allocation10 [shape = 'u8[32768]{0}', space=vmem, size = 0x8000, scoped, tag = 'input window, operand 6, single buffered']
    #allocation11 [shape = 'u8[32768]{0}', space=vmem, size = 0x8000, scoped, tag = 'input window, operand 7, single buffered']
    #allocation12 [shape = 's32[1]{0}', space=sflag, size = 0x4, scoped, tag = 'scoped memory for tpu_custom_call.1']
    #allocation13 [shape = 'u8[8192]{0}', space=vmem, size = 0x2000, scoped, tag = 'output window, operand 0, single buffered']
    %14 = vsyncpa [#allocation3], 0
    %15 = vsyncpa [#allocation6], 0
    %16 = vsyncpa [#allocation9], 0
    %17 = vsyncpa [#allocation12], 0
    %18 = vsyncpa [#allocation4], 0
    // Predicated region
    $region2: #{tpu_custom_call.1} parent=1 // pred_check
      _
    $region3: #{tpu_custom_call.1} parent=1 // pred_check_branch
      %20 = sbr.rel (0) target = $region5
    $region4: #{tpu_custom_call.1} parent=1 // pred_region
      %s22 = ssub.s32 128, 128
      %23 = vsyncadd [#allocation3], %s22
      %s24 = sshll.u32 [#allocation2], 4
      %s25 = int_to_ptr.vmem [resolvable:$true] %s24
      %30 = dma.hbm_to_vmem [thread:$0]  %s0, 128, %s25, [#allocation3], 64, 64, 4
    $region5: #{tpu_custom_call.1} parent=1 // pred_fallthru
      _
    // Predicated region
    $region6: #{tpu_custom_call.1} parent=1 // pred_check
      _
    $region7: #{tpu_custom_call.1} parent=1 // pred_check_branch
      %32 = sbr.rel (0) target = $region9
    $region8: #{tpu_custom_call.1} parent=1 // pred_region
      %s34 = ssub.s32 1024, 1024
      %35 = vsyncadd [#allocation6], %s34
      %s36 = sshll.u32 [#allocation5], 4
      %s37 = int_to_ptr.vmem [resolvable:$true] %s36
      %42 = dma.hbm_to_vmem [thread:$0]  %s1, 1024, %s37, [#allocation6], 64, 64, 4
    $region9: #{tpu_custom_call.1} parent=1 // pred_fallthru
      _
    // Predicated region
    $region10: #{tpu_custom_call.1} parent=1 // pred_check
      _
    $region11: #{tpu_custom_call.1} parent=1 // pred_check_branch
      %44 = sbr.rel (0) target = $region13
    $region12: #{tpu_custom_call.1} parent=1 // pred_region
      _
    $region13: #{tpu_custom_call.1} parent=1 // pred_fallthru
      _
    // Predicated region
    $region14: #{tpu_custom_call.1} parent=1 // pred_check
      _
    $region15: #{tpu_custom_call.1} parent=1 // pred_check_branch
      %46 = sbr.rel (0) target = $region17
    $region16: #{tpu_custom_call.1} parent=1 // pred_region
      %s48 = ssub.s32 1024, 1024
      %49 = vsyncadd [#allocation6], %s48
      %s50 = sshll.u32 [#allocation7], 4
      %s51 = int_to_ptr.vmem [resolvable:$true] %s50
      %56 = dma.hbm_to_vmem [thread:$0]  %s3, 1024, %s51, [#allocation6], 64, 64, 4
    $region17: #{tpu_custom_call.1} parent=1 // pred_fallthru
      _
    // Predicated region
    $region18: #{tpu_custom_call.1} parent=1 // pred_check
      _
    $region19: #{tpu_custom_call.1} parent=1 // pred_check_branch
      %58 = sbr.rel (0) target = $region21
    $region20: #{tpu_custom_call.1} parent=1 // pred_region
      %s60 = ssub.s32 1024, 1024
      %61 = vsyncadd [#allocation9], %s60
      %s62 = sshll.u32 [#allocation8], 4
      %s63 = int_to_ptr.vmem [resolvable:$true] %s62
      %68 = dma.hbm_to_vmem [thread:$0]  %s4, 1024, %s63, [#allocation9], 64, 64, 4
    $region21: #{tpu_custom_call.1} parent=1 // pred_fallthru
      _
    // Predicated region
    $region22: #{tpu_custom_call.1} parent=1 // pred_check
      _
    $region23: #{tpu_custom_call.1} parent=1 // pred_check_branch
      %70 = sbr.rel (0) target = $region25
    $region24: #{tpu_custom_call.1} parent=1 // pred_region
      _
    $region25: #{tpu_custom_call.1} parent=1 // pred_fallthru
      _
    // Predicated region
    $region26: #{tpu_custom_call.1} parent=1 // pred_check
      _
    $region27: #{tpu_custom_call.1} parent=1 // pred_check_branch
      %72 = sbr.rel (0) target = $region29
    $region28: #{tpu_custom_call.1} parent=1 // pred_region
      %s74 = ssub.s32 1024, 1024
      %75 = vsyncadd [#allocation9], %s74
      %s76 = sshll.u32 [#allocation10], 4
      %s77 = int_to_ptr.vmem [resolvable:$true] %s76
      %82 = dma.hbm_to_vmem [thread:$0]  %s6, 1024, %s77, [#allocation9], 64, 64, 4
    $region29: #{tpu_custom_call.1} parent=1 // pred_fallthru
      _
    // Predicated region
    $region30: #{tpu_custom_call.1} parent=1 // pred_check
      _
    $region31: #{tpu_custom_call.1} parent=1 // pred_check_branch
      %84 = sbr.rel (0) target = $region33
    $region32: #{tpu_custom_call.1} parent=1 // pred_region
      %s86 = ssub.s32 1024, 1024
      %87 = vsyncadd [#allocation12], %s86
      %s88 = sshll.u32 [#allocation11], 4
      %s89 = int_to_ptr.vmem [resolvable:$true] %s88
      %94 = dma.hbm_to_vmem [thread:$0]  %s7, 1024, %s89, [#allocation12], 64, 64, 4
    $region33: #{tpu_custom_call.1} parent=1 // pred_fallthru
      _
    // Predicated region
    $region34: #{tpu_custom_call.1} parent=1 // pred_check
      _
    $region35: #{tpu_custom_call.1} parent=1 // pred_check_branch
      %96 = sbr.rel (0) target = $region37
    $region36: #{tpu_custom_call.1} parent=1 // pred_region
      _
    $region37: #{tpu_custom_call.1} parent=1 // pred_fallthru
      _
    // Predicated region
    $region38: #{tpu_custom_call.1} parent=1 // pred_check
      _
    $region39: #{tpu_custom_call.1} parent=1 // pred_check_branch
      %98 = sbr.rel (0) target = $region41
    $region40: #{tpu_custom_call.1} parent=1 // pred_region
      %99 = dma.done [#allocation3], 128
    $region41: #{tpu_custom_call.1} parent=1 // pred_fallthru
      _
    // Predicated region
    $region42: #{tpu_custom_call.1} parent=1 // pred_check
      _
    $region43: #{tpu_custom_call.1} parent=1 // pred_check_branch
      %101 = sbr.rel (0) target = $region45
    $region44: #{tpu_custom_call.1} parent=1 // pred_region
      %102 = dma.done [#allocation6], 1024
    $region45: #{tpu_custom_call.1} parent=1 // pred_fallthru
      _
    // Predicated region
    $region46: #{tpu_custom_call.1} parent=1 // pred_check
      _
    $region47: #{tpu_custom_call.1} parent=1 // pred_check_branch
      %104 = sbr.rel (0) target = $region49
    $region48: #{tpu_custom_call.1} parent=1 // pred_region
      %105 = dma.done [#allocation6], 1024
    $region49: #{tpu_custom_call.1} parent=1 // pred_fallthru
      _
    // Predicated region
    $region50: #{tpu_custom_call.1} parent=1 // pred_check
      _
    $region51: #{tpu_custom_call.1} parent=1 // pred_check_branch
      %107 = sbr.rel (0) target = $region53
    $region52: #{tpu_custom_call.1} parent=1 // pred_region
      %108 = dma.done [#allocation9], 1024
    $region53: #{tpu_custom_call.1} parent=1 // pred_fallthru
      _
    // Predicated region
    $region54: #{tpu_custom_call.1} parent=1 // pred_check
      _
    $region55: #{tpu_custom_call.1} parent=1 // pred_check_branch
      %110 = sbr.rel (0) target = $region57
    $region56: #{tpu_custom_call.1} parent=1 // pred_region
      %111 = dma.done [#allocation9], 1024
    $region57: #{tpu_custom_call.1} parent=1 // pred_fallthru
      _
    // Predicated region
    $region58: #{tpu_custom_call.1} parent=1 // pred_check
      _
    $region59: #{tpu_custom_call.1} parent=1 // pred_check_branch
      %113 = sbr.rel (0) target = $region61
    $region60: #{tpu_custom_call.1} parent=1 // pred_region
      %114 = dma.done [#allocation12], 1024
    $region61: #{tpu_custom_call.1} parent=1 // pred_fallthru
      _
    %v116 = vld [vmem:[#allocation2] sm:$0xf]
    %v117 = vld [vmem:[#allocation2 + $0x4] sm:$0xf]
    %v118 = vld [vmem:[#allocation5] sm:$0xf]
    %v119 = vld [vmem:[#allocation5 + $0x4] sm:$0xf]
    %v120 = vld [vmem:[#allocation5 + $0x8] sm:$0xf]
    %v121 = vld [vmem:[#allocation5 + $0xc] sm:$0xf]
    %v122 = vld [vmem:[#allocation5 + $0x10] sm:$0xf]
    %v123 = vld [vmem:[#allocation5 + $0x14] sm:$0xf]
    %v124 = vld [vmem:[#allocation5 + $0x18] sm:$0xf]
    %v125 = vld [vmem:[#allocation5 + $0x1c] sm:$0xf]
    %v126 = vld [vmem:[#allocation5 + $0x20] sm:$0xf]
    %v127 = vld [vmem:[#allocation5 + $0x24] sm:$0xf]
    %v128 = vld [vmem:[#allocation5 + $0x28] sm:$0xf]
    %v129 = vld [vmem:[#allocation5 + $0x2c] sm:$0xf]
    %v130 = vld [vmem:[#allocation5 + $0x30] sm:$0xf]
    %v131 = vld [vmem:[#allocation5 + $0x34] sm:$0xf]
    %v132 = vld [vmem:[#allocation5 + $0x38] sm:$0xf]
    %v133 = vld [vmem:[#allocation5 + $0x3c] sm:$0xf]
    %v134 = vld [vmem:[%s2] sm:$0x1]
    %v136 = vlaneseq
    %v137 = vshrl.u32 %v136, 7
    %v138 = vsub.s32 0, %v137
    %v139 = vrot.slane %v134, %v138
    %v143 = vunpack.c.l.b16 %v116
    %v144 = vunpack.c.l.b16 %v117
    %v145 = vpack.c.b16 %v144, %v143
    %v163 = vunpack.c.l.b16 %v118
    %v164 = vunpack.c.l.b16 %v119
    %v165 = vunpack.c.l.b16 %v120
    %v166 = vunpack.c.l.b16 %v121
    %v167 = vunpack.c.l.b16 %v122
    %v168 = vunpack.c.l.b16 %v123
    %v169 = vunpack.c.l.b16 %v124
    %v170 = vunpack.c.l.b16 %v125
    %v171 = vunpack.c.l.b16 %v126
    %v172 = vunpack.c.l.b16 %v127
    %v173 = vunpack.c.l.b16 %v128
    %v174 = vunpack.c.l.b16 %v129
    %v175 = vunpack.c.l.b16 %v130
    %v176 = vunpack.c.l.b16 %v131
    %v177 = vunpack.c.l.b16 %v132
    %v178 = vunpack.c.l.b16 %v133
    %v179 = vpack.c.b16 %v164, %v163
    %v180 = vpack.c.b16 %v166, %v165
    %v181 = vpack.c.b16 %v168, %v167
    %v182 = vpack.c.b16 %v170, %v169
    %v183 = vpack.c.b16 %v172, %v171
    %v184 = vpack.c.b16 %v174, %v173
    %v185 = vpack.c.b16 %v176, %v175
    %v186 = vpack.c.b16 %v178, %v177
    %195 = vmatprep.subr.bf16.mxu0 0
    %196 = vmatpush1.bf16.msra.mxu0 %v179
    %197 = vmatprep.subr.bf16.mxu0 0
    %198 = vmatpush1.bf16.msra.mxu0 %v180
    %199 = vmatprep.subr.bf16.mxu0 0
    %200 = vmatpush1.bf16.msra.mxu0 %v181
    %201 = vmatprep.subr.bf16.mxu0 0
    %202 = vmatpush1.bf16.msra.mxu0 %v182
    %203 = vmatprep.subr.bf16.mxu0 0
    %204 = vmatpush1.bf16.msra.mxu0 %v183
    %205 = vmatprep.subr.bf16.mxu0 0
    %206 = vmatpush1.bf16.msra.mxu0 %v184
    %207 = vmatprep.subr.bf16.mxu0 0
    %208 = vmatpush1.bf16.msra.mxu0 %v185
    %209 = vmatprep.subr.bf16.mxu0 0
    %210 = vmatpush1.bf16.msra.mxu0 %v186
    %211 = vmatprep.subr.bf16.mxu0 0
    %212 = vmatpush1.bf16.msra.mxu0 0
    %213 = vmatprep.subr.bf16.mxu0 0
    %214 = vmatpush1.bf16.msra.mxu0 0
    %215 = vmatprep.subr.bf16.mxu0 0
    %216 = vmatpush1.bf16.msra.mxu0 0
    %217 = vmatprep.subr.bf16.mxu0 0
    %218 = vmatpush1.bf16.msra.mxu0 0
    %219 = vmatprep.subr.bf16.mxu0 0
    %220 = vmatpush1.bf16.msra.mxu0 0
    %221 = vmatprep.subr.bf16.mxu0 0
    %222 = vmatpush1.bf16.msra.mxu0 0
    %223 = vmatprep.subr.bf16.mxu0 0
    %224 = vmatpush1.bf16.msra.mxu0 0
    %225 = vmatprep.subr.bf16.mxu0 0
    %226 = vmatpush1.bf16.msra.mxu0 0
    %227 = vmatprep.mubr.bf16.mxu0 0
    %228 = vmatmul.mubr.bf16.gmra.mrb[0].mxu0 %v145
    %v229 = vpop.f32.mrb[0].mxu0
    %v230 = vadd.f32 %v139, %v229
    %v231 = vpop.f32.mrb[0].mxu0
    %v232 = vpop.f32.mrb[0].mxu0
    %v233 = vadd.f32 %v139, %v232
    %v234 = vpop.f32.mrb[0].mxu0
    %235 = vdwg.mxu0
    %v236 = vpack.c.bf16 %v233, %v230
    %v237 = vld [vmem:[#allocation7] sm:$0xf]
    %v238 = vld [vmem:[#allocation7 + $0x4] sm:$0xf]
    %v239 = vld [vmem:[#allocation7 + $0x8] sm:$0xf]
    %v240 = vld [vmem:[#allocation7 + $0xc] sm:$0xf]
    %v241 = vld [vmem:[#allocation7 + $0x10] sm:$0xf]
    %v242 = vld [vmem:[#allocation7 + $0x14] sm:$0xf]
    %v243 = vld [vmem:[#allocation7 + $0x18] sm:$0xf]
    %v244 = vld [vmem:[#allocation7 + $0x1c] sm:$0xf]
    %v245 = vld [vmem:[#allocation7 + $0x20] sm:$0xf]
    %v246 = vld [vmem:[#allocation7 + $0x24] sm:$0xf]
    %v247 = vld [vmem:[#allocation7 + $0x28] sm:$0xf]
    %v248 = vld [vmem:[#allocation7 + $0x2c] sm:$0xf]
    %v249 = vld [vmem:[#allocation7 + $0x30] sm:$0xf]
    %v250 = vld [vmem:[#allocation7 + $0x34] sm:$0xf]
    %v251 = vld [vmem:[#allocation7 + $0x38] sm:$0xf]
    %v252 = vld [vmem:[#allocation7 + $0x3c] sm:$0xf]
    %v269 = vunpack.c.l.b16 %v237
    %v270 = vunpack.c.l.b16 %v238
    %v271 = vunpack.c.l.b16 %v239
    %v272 = vunpack.c.l.b16 %v240
    %v273 = vunpack.c.l.b16 %v241
    %v274 = vunpack.c.l.b16 %v242
    %v275 = vunpack.c.l.b16 %v243
    %v276 = vunpack.c.l.b16 %v244
    %v277 = vunpack.c.l.b16 %v245
    %v278 = vunpack.c.l.b16 %v246
    %v279 = vunpack.c.l.b16 %v247
    %v280 = vunpack.c.l.b16 %v248
    %v281 = vunpack.c.l.b16 %v249
    %v282 = vunpack.c.l.b16 %v250
    %v283 = vunpack.c.l.b16 %v251
    %v284 = vunpack.c.l.b16 %v252
    %v285 = vpack.c.b16 %v270, %v269
    %v286 = vpack.c.b16 %v272, %v271
    %v287 = vpack.c.b16 %v274, %v273
    %v288 = vpack.c.b16 %v276, %v275
    %v289 = vpack.c.b16 %v278, %v277
    %v290 = vpack.c.b16 %v280, %v279
    %v291 = vpack.c.b16 %v282, %v281
    %v292 = vpack.c.b16 %v284, %v283
    %301 = vmatprep.subr.bf16.mxu0 0
    %302 = vmatpush1.bf16.msra.mxu0 %v285
    %303 = vmatprep.subr.bf16.mxu0 0
    %304 = vmatpush1.bf16.msra.mxu0 %v286
    %305 = vmatprep.subr.bf16.mxu0 0
    %306 = vmatpush1.bf16.msra.mxu0 %v287
    %307 = vmatprep.subr.bf16.mxu0 0
    %308 = vmatpush1.bf16.msra.mxu0 %v288
    %309 = vmatprep.subr.bf16.mxu0 0
    %310 = vmatpush1.bf16.msra.mxu0 %v289
    %311 = vmatprep.subr.bf16.mxu0 0
    %312 = vmatpush1.bf16.msra.mxu0 %v290
    %313 = vmatprep.subr.bf16.mxu0 0
    %314 = vmatpush1.bf16.msra.mxu0 %v291
    %315 = vmatprep.subr.bf16.mxu0 0
    %316 = vmatpush1.bf16.msra.mxu0 %v292
    %317 = vmatprep.subr.bf16.mxu0 0
    %318 = vmatpush1.bf16.msra.mxu0 0
    %319 = vmatprep.subr.bf16.mxu0 0
    %320 = vmatpush1.bf16.msra.mxu0 0
    %321 = vmatprep.subr.bf16.mxu0 0
    %322 = vmatpush1.bf16.msra.mxu0 0
    %323 = vmatprep.subr.bf16.mxu0 0
    %324 = vmatpush1.bf16.msra.mxu0 0
    %325 = vmatprep.subr.bf16.mxu0 0
    %326 = vmatpush1.bf16.msra.mxu0 0
    %327 = vmatprep.subr.bf16.mxu0 0
    %328 = vmatpush1.bf16.msra.mxu0 0
    %329 = vmatprep.subr.bf16.mxu0 0
    %330 = vmatpush1.bf16.msra.mxu0 0
    %331 = vmatprep.subr.bf16.mxu0 0
    %332 = vmatpush1.bf16.msra.mxu0 0
    %333 = vmatprep.mubr.bf16.mxu0 0
    %334 = vmatmul.mubr.bf16.gmra.mrb[0].mxu0 %v236
    %v335 = vpop.f32.mrb[0].mxu0
    %v336 = vadd.f32 0.0, %v335
    %v337 = vpop.f32.mrb[0].mxu0
    %v338 = vpop.f32.mrb[0].mxu0
    %v339 = vadd.f32 0.0, %v338
    %v340 = vpop.f32.mrb[0].mxu0
    %341 = vdwg.mxu0
    %v342 = vxor.u32 %v336, 2147483648
    %v343 = vxor.u32 %v339, 2147483648
    %v344 = vmul.f32 %v342, 1.442695
    %v345 = vpow.pop %v344
    %v346 = vmul.f32 %v343, 1.442695
    %v347 = vpow.pop %v346
    %v348 = vadd.f32 %v345, 1.0
    %v349 = vadd.f32 %v347, 1.0
    %v350 = vrcp.pop %v348
    %v351 = vmul.f32 1.0, %v350
    %v352 = vrcp.pop %v349
    %v353 = vmul.f32 1.0, %v352
    %v354 = vmul.f32 %v351, %v230
    %v355 = vmul.f32 %v353, %v233
    %v356 = vpack.c.bf16 %v355, %v354
    %v357 = vld [vmem:[#allocation8] sm:$0xf]
    %v358 = vld [vmem:[#allocation8 + $0x4] sm:$0xf]
    %v359 = vld [vmem:[#allocation8 + $0x8] sm:$0xf]
    %v360 = vld [vmem:[#allocation8 + $0xc] sm:$0xf]
    %v361 = vld [vmem:[#allocation8 + $0x10] sm:$0xf]
    %v362 = vld [vmem:[#allocation8 + $0x14] sm:$0xf]
    %v363 = vld [vmem:[#allocation8 + $0x18] sm:$0xf]
    %v364 = vld [vmem:[#allocation8 + $0x1c] sm:$0xf]
    %v365 = vld [vmem:[#allocation8 + $0x20] sm:$0xf]
    %v366 = vld [vmem:[#allocation8 + $0x24] sm:$0xf]
    %v367 = vld [vmem:[#allocation8 + $0x28] sm:$0xf]
    %v368 = vld [vmem:[#allocation8 + $0x2c] sm:$0xf]
    %v369 = vld [vmem:[#allocation8 + $0x30] sm:$0xf]
    %v370 = vld [vmem:[#allocation8 + $0x34] sm:$0xf]
    %v371 = vld [vmem:[#allocation8 + $0x38] sm:$0xf]
    %v372 = vld [vmem:[#allocation8 + $0x3c] sm:$0xf]
    %v373 = vld [vmem:[%s5] sm:$0x1]
    %v375 = vlaneseq
    %v376 = vshrl.u32 %v375, 7
    %v377 = vsub.s32 0, %v376
    %v378 = vrot.slane %v373, %v377
    %v396 = vunpack.c.l.b16 %v357
    %v397 = vunpack.c.l.b16 %v358
    %v398 = vunpack.c.l.b16 %v359
    %v399 = vunpack.c.l.b16 %v360
    %v400 = vunpack.c.l.b16 %v361
    %v401 = vunpack.c.l.b16 %v362
    %v402 = vunpack.c.l.b16 %v363
    %v403 = vunpack.c.l.b16 %v364
    %v404 = vunpack.c.l.b16 %v365
    %v405 = vunpack.c.l.b16 %v366
    %v406 = vunpack.c.l.b16 %v367
    %v407 = vunpack.c.l.b16 %v368
    %v408 = vunpack.c.l.b16 %v369
    %v409 = vunpack.c.l.b16 %v370
    %v410 = vunpack.c.l.b16 %v371
    %v411 = vunpack.c.l.b16 %v372
    %v412 = vpack.c.b16 %v397, %v396
    %v413 = vpack.c.b16 %v399, %v398
    %v414 = vpack.c.b16 %v401, %v400
    %v415 = vpack.c.b16 %v403, %v402
    %v416 = vpack.c.b16 %v405, %v404
    %v417 = vpack.c.b16 %v407, %v406
    %v418 = vpack.c.b16 %v409, %v408
    %v419 = vpack.c.b16 %v411, %v410
    %428 = vmatprep.subr.bf16.mxu0 0
    %429 = vmatpush1.bf16.msra.mxu0 %v412
    %430 = vmatprep.subr.bf16.mxu0 0
    %431 = vmatpush1.bf16.msra.mxu0 %v413
    %432 = vmatprep.subr.bf16.mxu0 0
    %433 = vmatpush1.bf16.msra.mxu0 %v414
    %434 = vmatprep.subr.bf16.mxu0 0
    %435 = vmatpush1.bf16.msra.mxu0 %v415
    %436 = vmatprep.subr.bf16.mxu0 0
    %437 = vmatpush1.bf16.msra.mxu0 %v416
    %438 = vmatprep.subr.bf16.mxu0 0
    %439 = vmatpush1.bf16.msra.mxu0 %v417
    %440 = vmatprep.subr.bf16.mxu0 0
    %441 = vmatpush1.bf16.msra.mxu0 %v418
    %442 = vmatprep.subr.bf16.mxu0 0
    %443 = vmatpush1.bf16.msra.mxu0 %v419
    %444 = vmatprep.subr.bf16.mxu0 0
    %445 = vmatpush1.bf16.msra.mxu0 0
    %446 = vmatprep.subr.bf16.mxu0 0
    %447 = vmatpush1.bf16.msra.mxu0 0
    %448 = vmatprep.subr.bf16.mxu0 0
    %449 = vmatpush1.bf16.msra.mxu0 0
    %450 = vmatprep.subr.bf16.mxu0 0
    %451 = vmatpush1.bf16.msra.mxu0 0
    %452 = vmatprep.subr.bf16.mxu0 0
    %453 = vmatpush1.bf16.msra.mxu0 0
    %454 = vmatprep.subr.bf16.mxu0 0
    %455 = vmatpush1.bf16.msra.mxu0 0
    %456 = vmatprep.subr.bf16.mxu0 0
    %457 = vmatpush1.bf16.msra.mxu0 0
    %458 = vmatprep.subr.bf16.mxu0 0
    %459 = vmatpush1.bf16.msra.mxu0 0
    %460 = vmatprep.mubr.bf16.mxu0 0
    %461 = vmatmul.mubr.bf16.gmra.mrb[0].mxu0 %v356
    %v462 = vpop.f32.mrb[0].mxu0
    %v463 = vadd.f32 %v378, %v462
    %v464 = vpop.f32.mrb[0].mxu0
    %v465 = vpop.f32.mrb[0].mxu0
    %v466 = vadd.f32 %v378, %v465
    %v467 = vpop.f32.mrb[0].mxu0
    %468 = vdwg.mxu0
    %v469 = vpack.c.bf16 %v466, %v463
    %v470 = vld [vmem:[#allocation10] sm:$0xf]
    %v471 = vld [vmem:[#allocation10 + $0x4] sm:$0xf]
    %v472 = vld [vmem:[#allocation10 + $0x8] sm:$0xf]
    %v473 = vld [vmem:[#allocation10 + $0xc] sm:$0xf]
    %v474 = vld [vmem:[#allocation10 + $0x10] sm:$0xf]
    %v475 = vld [vmem:[#allocation10 + $0x14] sm:$0xf]
    %v476 = vld [vmem:[#allocation10 + $0x18] sm:$0xf]
    %v477 = vld [vmem:[#allocation10 + $0x1c] sm:$0xf]
    %v478 = vld [vmem:[#allocation10 + $0x20] sm:$0xf]
    %v479 = vld [vmem:[#allocation10 + $0x24] sm:$0xf]
    %v480 = vld [vmem:[#allocation10 + $0x28] sm:$0xf]
    %v481 = vld [vmem:[#allocation10 + $0x2c] sm:$0xf]
    %v482 = vld [vmem:[#allocation10 + $0x30] sm:$0xf]
    %v483 = vld [vmem:[#allocation10 + $0x34] sm:$0xf]
    %v484 = vld [vmem:[#allocation10 + $0x38] sm:$0xf]
    %v485 = vld [vmem:[#allocation10 + $0x3c] sm:$0xf]
    %v502 = vunpack.c.l.b16 %v470
    %v503 = vunpack.c.l.b16 %v471
    %v504 = vunpack.c.l.b16 %v472
    %v505 = vunpack.c.l.b16 %v473
    %v506 = vunpack.c.l.b16 %v474
    %v507 = vunpack.c.l.b16 %v475
    %v508 = vunpack.c.l.b16 %v476
    %v509 = vunpack.c.l.b16 %v477
    %v510 = vunpack.c.l.b16 %v478
    %v511 = vunpack.c.l.b16 %v479
    %v512 = vunpack.c.l.b16 %v480
    %v513 = vunpack.c.l.b16 %v481
    %v514 = vunpack.c.l.b16 %v482
    %v515 = vunpack.c.l.b16 %v483
    %v516 = vunpack.c.l.b16 %v484
    %v517 = vunpack.c.l.b16 %v485
    %v518 = vpack.c.b16 %v503, %v502
    %v519 = vpack.c.b16 %v505, %v504
    %v520 = vpack.c.b16 %v507, %v506
    %v521 = vpack.c.b16 %v509, %v508
    %v522 = vpack.c.b16 %v511, %v510
    %v523 = vpack.c.b16 %v513, %v512
    %v524 = vpack.c.b16 %v515, %v514
    %v525 = vpack.c.b16 %v517, %v516
    %534 = vmatprep.subr.bf16.mxu0 0
    %535 = vmatpush1.bf16.msra.mxu0 %v518
    %536 = vmatprep.subr.bf16.mxu0 0
    %537 = vmatpush1.bf16.msra.mxu0 %v519
    %538 = vmatprep.subr.bf16.mxu0 0
    %539 = vmatpush1.bf16.msra.mxu0 %v520
    %540 = vmatprep.subr.bf16.mxu0 0
    %541 = vmatpush1.bf16.msra.mxu0 %v521
    %542 = vmatprep.subr.bf16.mxu0 0
    %543 = vmatpush1.bf16.msra.mxu0 %v522
    %544 = vmatprep.subr.bf16.mxu0 0
    %545 = vmatpush1.bf16.msra.mxu0 %v523
    %546 = vmatprep.subr.bf16.mxu0 0
    %547 = vmatpush1.bf16.msra.mxu0 %v524
    %548 = vmatprep.subr.bf16.mxu0 0
    %549 = vmatpush1.bf16.msra.mxu0 %v525
    %550 = vmatprep.subr.bf16.mxu0 0
    %551 = vmatpush1.bf16.msra.mxu0 0
    %552 = vmatprep.subr.bf16.mxu0 0
    %553 = vmatpush1.bf16.msra.mxu0 0
    %554 = vmatprep.subr.bf16.mxu0 0
    %555 = vmatpush1.bf16.msra.mxu0 0
    %556 = vmatprep.subr.bf16.mxu0 0
    %557 = vmatpush1.bf16.msra.mxu0 0
    %558 = vmatprep.subr.bf16.mxu0 0
    %559 = vmatpush1.bf16.msra.mxu0 0
    %560 = vmatprep.subr.bf16.mxu0 0
    %561 = vmatpush1.bf16.msra.mxu0 0
    %562 = vmatprep.subr.bf16.mxu0 0
    %563 = vmatpush1.bf16.msra.mxu0 0
    %564 = vmatprep.subr.bf16.mxu0 0
    %565 = vmatpush1.bf16.msra.mxu0 0
    %566 = vmatprep.mubr.bf16.mxu0 0
    %567 = vmatmul.mubr.bf16.gmra.mrb[0].mxu0 %v469
    %v568 = vpop.f32.mrb[0].mxu0
    %v569 = vadd.f32 0.0, %v568
    %v570 = vpop.f32.mrb[0].mxu0
    %v571 = vpop.f32.mrb[0].mxu0
    %v572 = vadd.f32 0.0, %v571
    %v573 = vpop.f32.mrb[0].mxu0
    %574 = vdwg.mxu0
    %v575 = vxor.u32 %v569, 2147483648
    %v576 = vxor.u32 %v572, 2147483648
    %v577 = vmul.f32 %v575, 1.442695
    %v578 = vpow.pop %v577
    %v579 = vmul.f32 %v576, 1.442695
    %v580 = vpow.pop %v579
    %v581 = vadd.f32 %v578, 1.0
    %v582 = vadd.f32 %v580, 1.0
    %v583 = vrcp.pop %v581
    %v584 = vmul.f32 1.0, %v583
    %v585 = vrcp.pop %v582
    %v586 = vmul.f32 1.0, %v585
    %v587 = vmul.f32 %v584, %v463
    %v588 = vmul.f32 %v586, %v466
    %v589 = vpack.c.bf16 %v588, %v587
    %v590 = vld [vmem:[#allocation11] sm:$0xf]
    %v591 = vld [vmem:[#allocation11 + $0x4] sm:$0xf]
    %v592 = vld [vmem:[#allocation11 + $0x8] sm:$0xf]
    %v593 = vld [vmem:[#allocation11 + $0xc] sm:$0xf]
    %v594 = vld [vmem:[#allocation11 + $0x10] sm:$0xf]
    %v595 = vld [vmem:[#allocation11 + $0x14] sm:$0xf]
    %v596 = vld [vmem:[#allocation11 + $0x18] sm:$0xf]
    %v597 = vld [vmem:[#allocation11 + $0x1c] sm:$0xf]
    %v598 = vld [vmem:[#allocation11 + $0x20] sm:$0xf]
    %v599 = vld [vmem:[#allocation11 + $0x24] sm:$0xf]
    %v600 = vld [vmem:[#allocation11 + $0x28] sm:$0xf]
    %v601 = vld [vmem:[#allocation11 + $0x2c] sm:$0xf]
    %v602 = vld [vmem:[#allocation11 + $0x30] sm:$0xf]
    %v603 = vld [vmem:[#allocation11 + $0x34] sm:$0xf]
    %v604 = vld [vmem:[#allocation11 + $0x38] sm:$0xf]
    %v605 = vld [vmem:[#allocation11 + $0x3c] sm:$0xf]
    %v606 = vld [vmem:[%s8] sm:$0x1]
    %v608 = vlaneseq
    %v609 = vshrl.u32 %v608, 7
    %v610 = vsub.s32 0, %v609
    %v611 = vrot.slane %v606, %v610
    %v629 = vunpack.c.l.b16 %v590
    %v630 = vunpack.c.l.b16 %v591
    %v631 = vunpack.c.l.b16 %v592
    %v632 = vunpack.c.l.b16 %v593
    %v633 = vunpack.c.l.b16 %v594
    %v634 = vunpack.c.l.b16 %v595
    %v635 = vunpack.c.l.b16 %v596
    %v636 = vunpack.c.l.b16 %v597
    %v637 = vunpack.c.l.b16 %v598
    %v638 = vunpack.c.l.b16 %v599
    %v639 = vunpack.c.l.b16 %v600
    %v640 = vunpack.c.l.b16 %v601
    %v641 = vunpack.c.l.b16 %v602
    %v642 = vunpack.c.l.b16 %v603
    %v643 = vunpack.c.l.b16 %v604
    %v644 = vunpack.c.l.b16 %v605
    %v645 = vpack.c.b16 %v630, %v629
    %v646 = vpack.c.b16 %v632, %v631
    %v647 = vpack.c.b16 %v634, %v633
    %v648 = vpack.c.b16 %v636, %v635
    %v649 = vpack.c.b16 %v638, %v637
    %v650 = vpack.c.b16 %v640, %v639
    %v651 = vpack.c.b16 %v642, %v641
    %v652 = vpack.c.b16 %v644, %v643
    %661 = vmatprep.subr.bf16.mxu0 0
    %662 = vmatpush1.bf16.msra.mxu0 %v645
    %663 = vmatprep.subr.bf16.mxu0 0
    %664 = vmatpush1.bf16.msra.mxu0 %v646
    %665 = vmatprep.subr.bf16.mxu0 0
    %666 = vmatpush1.bf16.msra.mxu0 %v647
    %667 = vmatprep.subr.bf16.mxu0 0
    %668 = vmatpush1.bf16.msra.mxu0 %v648
    %669 = vmatprep.subr.bf16.mxu0 0
    %670 = vmatpush1.bf16.msra.mxu0 %v649
    %671 = vmatprep.subr.bf16.mxu0 0
    %672 = vmatpush1.bf16.msra.mxu0 %v650
    %673 = vmatprep.subr.bf16.mxu0 0
    %674 = vmatpush1.bf16.msra.mxu0 %v651
    %675 = vmatprep.subr.bf16.mxu0 0
    %676 = vmatpush1.bf16.msra.mxu0 %v652
    %677 = vmatprep.subr.bf16.mxu0 0
    %678 = vmatpush1.bf16.msra.mxu0 0
    %679 = vmatprep.subr.bf16.mxu0 0
    %680 = vmatpush1.bf16.msra.mxu0 0
    %681 = vmatprep.subr.bf16.mxu0 0
    %682 = vmatpush1.bf16.msra.mxu0 0
    %683 = vmatprep.subr.bf16.mxu0 0
    %684 = vmatpush1.bf16.msra.mxu0 0
    %685 = vmatprep.subr.bf16.mxu0 0
    %686 = vmatpush1.bf16.msra.mxu0 0
    %687 = vmatprep.subr.bf16.mxu0 0
    %688 = vmatpush1.bf16.msra.mxu0 0
    %689 = vmatprep.subr.bf16.mxu0 0
    %690 = vmatpush1.bf16.msra.mxu0 0
    %691 = vmatprep.subr.bf16.mxu0 0
    %692 = vmatpush1.bf16.msra.mxu0 0
    %693 = vmatprep.mubr.bf16.mxu0 0
    %694 = vmatmul.mubr.bf16.gmra.mrb[0].mxu0 %v589
    %v695 = vpop.f32.mrb[0].mxu0
    %v696 = vadd.f32 %v611, %v695
    %v697 = vpop.f32.mrb[0].mxu0
    %v698 = vpop.f32.mrb[0].mxu0
    %v699 = vadd.f32 %v611, %v698
    %v700 = vpop.f32.mrb[0].mxu0
    %701 = vdwg.mxu0
    %702 = vst [vmem:[#allocation13] sm:$0xff] %v696
    %703 = vst [vmem:[#allocation13 + $0x8] sm:$0xff] %v699
    // Predicated region
    $region62: #{tpu_custom_call.1} parent=1 // pred_check
      _
    $region63: #{tpu_custom_call.1} parent=1 // pred_check_branch
      %705 = sbr.rel (0) target = $region65
    $region64: #{tpu_custom_call.1} parent=1 // pred_region
      %s707 = ssub.s32 256, 256
      %708 = vsyncadd [#allocation4], %s707
      %s709 = sshll.u32 [#allocation13], 4
      %s710 = int_to_ptr.vmem [resolvable:$true] %s709
      %715 = dma.vmem_to_hbm [thread:$0]  %s710, 256, %s9, [#allocation4], 128, 128, 8
    $region65: #{tpu_custom_call.1} parent=1 // pred_fallthru
      _
    // Predicated region
    $region66: #{tpu_custom_call.1} parent=1 // pred_check
      _
    $region67: #{tpu_custom_call.1} parent=1 // pred_check_branch
      %717 = sbr.rel (0) target = $region69
    $region68: #{tpu_custom_call.1} parent=1 // pred_region
      %718 = dma.done [#allocation4], 256
    $region69: #{tpu_custom_call.1} parent=1 // pred_fallthru
      _
    %719 = vsyncpa [#allocation3], 1
    %720 = vsyncpa [#allocation6], 1
    %721 = vsyncpa [#allocation9], 1
    %722 = vsyncpa [#allocation12], 1
    %723 = vsyncpa [#allocation4], 1

</llo_original>
